<compile_context>
chip_gen: v7x
topology: tpu7x:2x2x1
jax: 0.10.0
libtpu: 0.0.40
codegen_flags: <defaults>
</compile_context>

<pallas_src>
import functools

import numpy as np
import jax
import jax.numpy as jnp
from jax import lax
from jax.experimental import pallas as pl
from jax.experimental.pallas import tpu as pltpu


# Abramowitz & Stegun 4.4.49 minimax coefficients for atan(t), t in [0, 1].
_A1 = 0.9998660
_A3 = -0.3302995
_A5 = 0.1801410
_A7 = -0.0851330
_A9 = 0.0208351
_HALF_PI = float(np.pi / 2.0)
_PI = float(np.pi)
_TWO_PI = float(2.0 * np.pi)

_LANE = 128


def _atan_poly(t):
  """Odd minimax polynomial for atan(t), t in [0, 1] (|err| <= ~1e-5)."""
  z = t * t
  return ((((_A9 * z + _A7) * z + _A5) * z + _A3) * z + _A1) * t


def _atan2_kernel(y, x):
  """atan2(y, x) inside the kernel: min/max reduction + approx reciprocal.

  Valid when (x, y) never both vanish (true here: |h| == 1 on the circle).
  """
  abs_y = jnp.abs(y)
  abs_x = jnp.abs(x)
  mn = jnp.minimum(abs_y, abs_x)
  mx = jnp.maximum(abs_y, abs_x)
  inv_mx = pl.reciprocal(mx, approx=True)
  inv_mx = inv_mx * (2.0 - mx * inv_mx)          # one Newton step (~1e-7 rel)
  a = _atan_poly(mn * inv_mx)                    # atan(t), t in [0, 1]
  a = jnp.where(abs_y > abs_x, _HALF_PI - a, a)  # [0, pi/2]
  a = jnp.where(x >= 0.0, a, _PI - a)            # [0, pi]
  return jnp.where(y >= 0.0, a, -a)


def _atan2_host(y, x):
  """Same polynomial atan2 for the wrapper (exact divide, runs in XLA)."""
  abs_y = jnp.abs(y)
  abs_x = jnp.abs(x)
  mn = jnp.minimum(abs_y, abs_x)
  mx = jnp.maximum(abs_y, abs_x)
  a = _atan_poly(mn / mx)
  a = jnp.where(abs_y > abs_x, _HALF_PI - a, a)
  a = jnp.where(x >= 0.0, a, _PI - a)
  return jnp.where(y >= 0.0, a, -a)


def mobius_kernel(x_ref, weights_ref, wx_ref, wy_ref, shifts_ref,
                  tx_ref, dtx_ref, *, K, sub):
  # Hoist all scalar parameter reads (SMEM -> sregs) out of the chunk loop.
  wk = [weights_ref[k] for k in range(K)]
  wxk = [wx_ref[k] for k in range(K)]
  wyk = [wy_ref[k] for k in range(K)]
  shk = [shifts_ref[k] for k in range(K)]
  one_m_wn2 = [1.0 - (wxk[k] * wxk[k] + wyk[k] * wyk[k]) for k in range(K)]

  n_chunks = x_ref.shape[0] // sub

  def chunk(c, carry):
    r0 = pl.multiple_of(c * sub, sub)
    x = x_ref[pl.ds(r0, sub), :]              # (sub, 128) angles, fully dense
    cx = jnp.cos(x)                           # z = (cos x, sin x)
    sx = jnp.sin(x)
    tx_acc = jnp.zeros_like(x)
    dtx_acc = jnp.zeros_like(x)
    for k in range(K):                        # scalar-K loop, unrolled
      # h(z, w) = (1 - |w|^2) / |z - w|^2 * (z - w) - w
      dx = cx - wxk[k]
      dy = sx - wyk[k]
      d2 = dx * dx + dy * dy
      inv_d2 = pl.reciprocal(d2, approx=True)
      inv_d2 = inv_d2 * (2.0 - d2 * inv_d2)   # Newton step -> ~1e-7 rel err
      coef = one_m_wn2[k] * inv_d2
      hx = coef * dx - wxk[k]
      hy = coef * dy - wyk[k]
      radians = _atan2_kernel(hy, hx)
      t = radians - shk[k]
      t = jnp.where(t >= 0.0, t, t + _TWO_PI)
      tx_acc = tx_acc + wk[k] * t
      # |dh/dtheta| == coef exactly (coef * reflection applied to unit vector).
      dtx_acc = dtx_acc + wk[k] * coef
    tx_ref[pl.ds(r0, sub), :] = tx_acc
    dtx_ref[pl.ds(r0, sub), :] = dtx_acc
    return carry

  lax.fori_loop(0, n_chunks, chunk, 0)


def mobius_forward(x, weights_raw, w_raw, *, tile_rows=256, sub_rows=16):
  """Unconditional MobiusTransform.forward: returns (tx (N,1), dtx (N,))."""
  N = x.shape[0]
  K = weights_raw.shape[1]

  # Parameter preparation (mirrors the PyTorch forward() preamble).
  weights = jax.nn.softmax(weights_raw, axis=1)                       # (1, K)
  w = 0.99 / (1.0 + jnp.linalg.norm(w_raw, axis=-1, keepdims=True)) * w_raw
  wx = w[..., 0].reshape(K).astype(jnp.float32)                       # (K,)
  wy = w[..., 1].reshape(K).astype(jnp.float32)                       # (K,)

  # Per-component angular shift h((1,0), w): depends only on w -> hoisted.
  # Uses the SAME atan2 polynomial as the kernel for wrap-boundary consistency.
  one_m_wn2 = 1.0 - (wx * wx + wy * wy)
  d0x = 1.0 - wx
  d0y = -wy
  coef0 = one_m_wn2 / (d0x * d0x + d0y * d0y)
  shifts = _atan2_host(coef0 * d0y - wy, coef0 * d0x - wx)            # (K,)

  weights_c = weights.reshape(K).astype(jnp.float32)
  shifts_c = shifts.astype(jnp.float32)

  # Dense sample layout: (rows_pad, 128), tiled along rows.
  rows = max(1, -(-N // _LANE))
  rows8 = ((rows + 7) // 8) * 8
  tr = max(8, (min(tile_rows, rows8) // 8) * 8)
  rows_pad = ((rows8 + tr - 1) // tr) * tr
  n_pad = rows_pad * _LANE
  sub = sub_rows if (sub_rows > 0 and tr % sub_rows == 0) else 8

  x_flat = jnp.zeros((n_pad,), jnp.float32).at[:N].set(
      x.reshape(N).astype(jnp.float32))
  x2d = x_flat.reshape(rows_pad, _LANE)

  kernel = functools.partial(mobius_kernel, K=K, sub=sub)
  smem_spec = pl.BlockSpec(memory_space=pltpu.MemorySpace.SMEM)

  tx2d, dtx2d = pl.pallas_call(
      kernel,
      out_shape=(jax.ShapeDtypeStruct((rows_pad, _LANE), jnp.float32),
                 jax.ShapeDtypeStruct((rows_pad, _LANE), jnp.float32)),
      grid_spec=pltpu.PrefetchScalarGridSpec(
          num_scalar_prefetch=0,
          grid=(rows_pad // tr,),
          in_specs=[
              pl.BlockSpec((tr, _LANE), lambda i: (i, 0)),
              smem_spec,   # weights (K,)
              smem_spec,   # wx      (K,)
              smem_spec,   # wy      (K,)
              smem_spec,   # shifts  (K,)
          ],
          out_specs=[
              pl.BlockSpec((tr, _LANE), lambda i: (i, 0)),
              pl.BlockSpec((tr, _LANE), lambda i: (i, 0)),
          ]),
      compiler_params=pltpu.CompilerParams(
          # Single "parallel" axis: shards row-tiles across both TCs on v7x.
          dimension_semantics=("parallel",)),
  )(x2d, weights_c, wx, wy, shifts_c)

  tx = tx2d.reshape(-1)[:N].reshape(N, 1)
  dtx = dtx2d.reshape(-1)[:N]
  return tx, dtx


def mobius_reference(x, weights_raw, w_raw):
  """Pure-JAX transcription of the PyTorch module (for a sanity check)."""
  weights = jax.nn.softmax(weights_raw, axis=1)
  w = 0.99 / (1.0 + jnp.linalg.norm(w_raw, axis=-1, keepdims=True)) * w_raw
  z = jnp.concatenate([jnp.cos(x), jnp.sin(x)], axis=1)               # (N, 2)

  def h(zz, w):
    w_norm = jnp.linalg.norm(w, axis=-1, keepdims=True)
    diff = zz.reshape(-1, 1, 2) - w
    return (1.0 - w_norm ** 2) / jnp.linalg.norm(
        diff, axis=-1, keepdims=True) ** 2 * diff - w

  h_z = h(z, w)
  h_zero = h(jnp.array([[1.0, 0.0]], dtype=jnp.float32), w)
  radians = jnp.arctan2(h_z[..., 1], h_z[..., 0])
  shifts = jnp.arctan2(h_zero[..., 1], h_zero[..., 0])
  tx = radians - shifts
  tx = jnp.where(tx >= 0, tx, tx + 2.0 * jnp.pi)
  tx = jnp.sum(weights * tx, axis=1, keepdims=True)

  z_w = z[:, None, :] - w
  z_w_norm = jnp.linalg.norm(z_w, axis=-1)
  z_w_unit = z_w / z_w_norm[..., None]
  dz = jnp.concatenate([-jnp.sin(x), jnp.cos(x)], axis=1)
  eye = jnp.eye(2, dtype=jnp.float32)
  dh_dz = (1.0 - jnp.linalg.norm(w, axis=-1) ** 2)[..., None, None] * (
      eye[None, None] - 2.0 * jnp.einsum('nki,nkj->nkij', z_w_unit, z_w_unit)
  ) / z_w_norm[..., None, None] ** 2
  dh_dtheta = jnp.einsum('nkpq,nq->nkp', dh_dz, dz)
  dtx = jnp.sum(jnp.linalg.norm(dh_dtheta, axis=-1) * weights, axis=1)
  return tx, dtx


if __name__ == "__main__":
  K = 8      # number of Mobius components (module __init__ arg)
  N = 64     # batch of angles

  key = jax.random.PRNGKey(0)
  k_w, k_c, k_x = jax.random.split(key, 3)
  # Deterministic stand-ins for nn.Parameter(torch.randn(...)):
  weights_raw = jax.random.normal(k_w, (1, K), dtype=jnp.float32)
  w_raw = jax.random.normal(k_c, (1, K, 2), dtype=jnp.float32)
  # Input angles, shape (N, 1) like the PyTorch forward expects.
  x = jax.random.uniform(k_x, (N, 1), dtype=jnp.float32,
                         minval=0.0, maxval=2.0 * np.pi)

  tx, dtx = mobius_forward(x, weights_raw, w_raw)
  jax.block_until_ready((tx, dtx))

  tx_ref, dtx_ref = mobius_reference(x, weights_raw, w_raw)
  assert tx.shape == (N, 1) and dtx.shape == (N,)
  np.testing.assert_allclose(np.asarray(tx), np.asarray(tx_ref),
                             rtol=1e-3, atol=1e-3)
  np.testing.assert_allclose(np.asarray(dtx), np.asarray(dtx_ref),
                             rtol=1e-3, atol=1e-3)
  print("KERNEL_OK")
</pallas_src>

<mosaic_0001>
module attributes {stable_mosaic.version = 11 : i64} {
  func.func @mobius_kernel(%arg0: i32, %arg1: memref<8x128xf32, #tpu.memory_space<vmem>>, %arg2: memref<8xf32, #tpu.memory_space<smem>>, %arg3: memref<8xf32, #tpu.memory_space<smem>>, %arg4: memref<8xf32, #tpu.memory_space<smem>>, %arg5: memref<8xf32, #tpu.memory_space<smem>>, %arg6: memref<8x128xf32, #tpu.memory_space<vmem>>, %arg7: memref<8x128xf32, #tpu.memory_space<vmem>>) attributes {dimension_semantics = [#tpu.dimension_semantics<parallel>], iteration_bounds = array<i64: 1>, scalar_prefetch = 0 : i64, scratch_operands = 0 : i64, tpu.core_type = #tpu.core_type<tc>, window_params = [{transform_indices = @transform_0, window_bounds = array<i64: 8, 128>}, {transform_indices = @transform_1, window_bounds = array<i64: 8>}, {transform_indices = @transform_2, window_bounds = array<i64: 8>}, {transform_indices = @transform_3, window_bounds = array<i64: 8>}, {transform_indices = @transform_4, window_bounds = array<i64: 8>}, {transform_indices = @transform_5, window_bounds = array<i64: 8, 128>}, {transform_indices = @transform_6, window_bounds = array<i64: 8, 128>}]} {
    %c0 = arith.constant 0 : index
    %0 = memref.load %arg2[%c0] : memref<8xf32, #tpu.memory_space<smem>>
    %c1 = arith.constant 1 : index
    %1 = memref.load %arg2[%c1] : memref<8xf32, #tpu.memory_space<smem>>
    %c2 = arith.constant 2 : index
    %2 = memref.load %arg2[%c2] : memref<8xf32, #tpu.memory_space<smem>>
    %c3 = arith.constant 3 : index
    %3 = memref.load %arg2[%c3] : memref<8xf32, #tpu.memory_space<smem>>
    %c4 = arith.constant 4 : index
    %4 = memref.load %arg2[%c4] : memref<8xf32, #tpu.memory_space<smem>>
    %c5 = arith.constant 5 : index
    %5 = memref.load %arg2[%c5] : memref<8xf32, #tpu.memory_space<smem>>
    %c6 = arith.constant 6 : index
    %6 = memref.load %arg2[%c6] : memref<8xf32, #tpu.memory_space<smem>>
    %c7 = arith.constant 7 : index
    %7 = memref.load %arg2[%c7] : memref<8xf32, #tpu.memory_space<smem>>
    %c0_0 = arith.constant 0 : index
    %8 = memref.load %arg3[%c0_0] : memref<8xf32, #tpu.memory_space<smem>>
    %c1_1 = arith.constant 1 : index
    %9 = memref.load %arg3[%c1_1] : memref<8xf32, #tpu.memory_space<smem>>
    %c2_2 = arith.constant 2 : index
    %10 = memref.load %arg3[%c2_2] : memref<8xf32, #tpu.memory_space<smem>>
    %c3_3 = arith.constant 3 : index
    %11 = memref.load %arg3[%c3_3] : memref<8xf32, #tpu.memory_space<smem>>
    %c4_4 = arith.constant 4 : index
    %12 = memref.load %arg3[%c4_4] : memref<8xf32, #tpu.memory_space<smem>>
    %c5_5 = arith.constant 5 : index
    %13 = memref.load %arg3[%c5_5] : memref<8xf32, #tpu.memory_space<smem>>
    %c6_6 = arith.constant 6 : index
    %14 = memref.load %arg3[%c6_6] : memref<8xf32, #tpu.memory_space<smem>>
    %c7_7 = arith.constant 7 : index
    %15 = memref.load %arg3[%c7_7] : memref<8xf32, #tpu.memory_space<smem>>
    %c0_8 = arith.constant 0 : index
    %16 = memref.load %arg4[%c0_8] : memref<8xf32, #tpu.memory_space<smem>>
    %c1_9 = arith.constant 1 : index
    %17 = memref.load %arg4[%c1_9] : memref<8xf32, #tpu.memory_space<smem>>
    %c2_10 = arith.constant 2 : index
    %18 = memref.load %arg4[%c2_10] : memref<8xf32, #tpu.memory_space<smem>>
    %c3_11 = arith.constant 3 : index
    %19 = memref.load %arg4[%c3_11] : memref<8xf32, #tpu.memory_space<smem>>
    %c4_12 = arith.constant 4 : index
    %20 = memref.load %arg4[%c4_12] : memref<8xf32, #tpu.memory_space<smem>>
    %c5_13 = arith.constant 5 : index
    %21 = memref.load %arg4[%c5_13] : memref<8xf32, #tpu.memory_space<smem>>
    %c6_14 = arith.constant 6 : index
    %22 = memref.load %arg4[%c6_14] : memref<8xf32, #tpu.memory_space<smem>>
    %c7_15 = arith.constant 7 : index
    %23 = memref.load %arg4[%c7_15] : memref<8xf32, #tpu.memory_space<smem>>
    %c0_16 = arith.constant 0 : index
    %24 = memref.load %arg5[%c0_16] : memref<8xf32, #tpu.memory_space<smem>>
    %c1_17 = arith.constant 1 : index
    %25 = memref.load %arg5[%c1_17] : memref<8xf32, #tpu.memory_space<smem>>
    %c2_18 = arith.constant 2 : index
    %26 = memref.load %arg5[%c2_18] : memref<8xf32, #tpu.memory_space<smem>>
    %c3_19 = arith.constant 3 : index
    %27 = memref.load %arg5[%c3_19] : memref<8xf32, #tpu.memory_space<smem>>
    %c4_20 = arith.constant 4 : index
    %28 = memref.load %arg5[%c4_20] : memref<8xf32, #tpu.memory_space<smem>>
    %c5_21 = arith.constant 5 : index
    %29 = memref.load %arg5[%c5_21] : memref<8xf32, #tpu.memory_space<smem>>
    %c6_22 = arith.constant 6 : index
    %30 = memref.load %arg5[%c6_22] : memref<8xf32, #tpu.memory_space<smem>>
    %c7_23 = arith.constant 7 : index
    %31 = memref.load %arg5[%c7_23] : memref<8xf32, #tpu.memory_space<smem>>
    %32 = arith.mulf %8, %8 : f32
    %33 = arith.mulf %16, %16 : f32
    %34 = arith.addf %32, %33 : f32
    %cst = arith.constant 1.000000e+00 : f32
    %35 = arith.subf %cst, %34 : f32
    %36 = arith.mulf %9, %9 : f32
    %37 = arith.mulf %17, %17 : f32
    %38 = arith.addf %36, %37 : f32
    %cst_24 = arith.constant 1.000000e+00 : f32
    %39 = arith.subf %cst_24, %38 : f32
    %40 = arith.mulf %10, %10 : f32
    %41 = arith.mulf %18, %18 : f32
    %42 = arith.addf %40, %41 : f32
    %cst_25 = arith.constant 1.000000e+00 : f32
    %43 = arith.subf %cst_25, %42 : f32
    %44 = arith.mulf %11, %11 : f32
    %45 = arith.mulf %19, %19 : f32
    %46 = arith.addf %44, %45 : f32
    %cst_26 = arith.constant 1.000000e+00 : f32
    %47 = arith.subf %cst_26, %46 : f32
    %48 = arith.mulf %12, %12 : f32
    %49 = arith.mulf %20, %20 : f32
    %50 = arith.addf %48, %49 : f32
    %cst_27 = arith.constant 1.000000e+00 : f32
    %51 = arith.subf %cst_27, %50 : f32
    %52 = arith.mulf %13, %13 : f32
    %53 = arith.mulf %21, %21 : f32
    %54 = arith.addf %52, %53 : f32
    %cst_28 = arith.constant 1.000000e+00 : f32
    %55 = arith.subf %cst_28, %54 : f32
    %56 = arith.mulf %14, %14 : f32
    %57 = arith.mulf %22, %22 : f32
    %58 = arith.addf %56, %57 : f32
    %cst_29 = arith.constant 1.000000e+00 : f32
    %59 = arith.subf %cst_29, %58 : f32
    %60 = arith.mulf %15, %15 : f32
    %61 = arith.mulf %23, %23 : f32
    %62 = arith.addf %60, %61 : f32
    %cst_30 = arith.constant 1.000000e+00 : f32
    %63 = arith.subf %cst_30, %62 : f32
    %c0_i32 = arith.constant 0 : i32
    %c8_i32 = arith.constant 8 : i32
    %64 = arith.muli %c0_i32, %c8_i32 : i32
    %65 = tpu.assume_multiple %64, 8 : i32
    %66 = arith.index_cast %65 : i32 to index
    %c0_31 = arith.constant 0 : index
    %67 = vector.load %arg1[%66, %c0_31] : memref<8x128xf32, #tpu.memory_space<vmem>>, vector<8x128xf32>
    %68 = math.cos %67 : vector<8x128xf32>
    %69 = math.sin %67 : vector<8x128xf32>
    %cst_32 = arith.constant 0.000000e+00 : f32
    %70 = vector.broadcast %cst_32 : f32 to vector<8x128xf32>
    %cst_33 = arith.constant 0.000000e+00 : f32
    %71 = vector.broadcast %cst_33 : f32 to vector<8x128xf32>
    %72 = vector.broadcast %8 : f32 to vector<8x128xf32>
    %73 = arith.subf %68, %72 : vector<8x128xf32>
    %74 = vector.broadcast %16 : f32 to vector<8x128xf32>
    %75 = arith.subf %69, %74 : vector<8x128xf32>
    %76 = arith.mulf %73, %73 : vector<8x128xf32>
    %77 = arith.mulf %75, %75 : vector<8x128xf32>
    %78 = arith.addf %76, %77 : vector<8x128xf32>
    %79 = tpu.reciprocal %78 {approx = true} : vector<8x128xf32> -> vector<8x128xf32>
    %80 = arith.mulf %78, %79 : vector<8x128xf32>
    %cst_34 = arith.constant 2.000000e+00 : f32
    %81 = vector.broadcast %cst_34 : f32 to vector<8x128xf32>
    %82 = arith.subf %81, %80 : vector<8x128xf32>
    %83 = arith.mulf %79, %82 : vector<8x128xf32>
    %84 = vector.broadcast %35 : f32 to vector<8x128xf32>
    %85 = arith.mulf %84, %83 : vector<8x128xf32>
    %86 = arith.mulf %85, %73 : vector<8x128xf32>
    %87 = vector.broadcast %8 : f32 to vector<8x128xf32>
    %88 = arith.subf %86, %87 : vector<8x128xf32>
    %89 = arith.mulf %85, %75 : vector<8x128xf32>
    %90 = vector.broadcast %16 : f32 to vector<8x128xf32>
    %91 = arith.subf %89, %90 : vector<8x128xf32>
    %92 = math.absf %91 : vector<8x128xf32>
    %93 = math.absf %88 : vector<8x128xf32>
    %94 = arith.minimumf %92, %93 : vector<8x128xf32>
    %95 = arith.maximumf %92, %93 : vector<8x128xf32>
    %96 = tpu.reciprocal %95 {approx = true} : vector<8x128xf32> -> vector<8x128xf32>
    %97 = arith.mulf %95, %96 : vector<8x128xf32>
    %cst_35 = arith.constant 2.000000e+00 : f32
    %98 = vector.broadcast %cst_35 : f32 to vector<8x128xf32>
    %99 = arith.subf %98, %97 : vector<8x128xf32>
    %100 = arith.mulf %96, %99 : vector<8x128xf32>
    %101 = arith.mulf %94, %100 : vector<8x128xf32>
    %102 = arith.mulf %101, %101 : vector<8x128xf32>
    %cst_36 = arith.constant 2.083510e-02 : f32
    %103 = vector.broadcast %cst_36 : f32 to vector<8x128xf32>
    %104 = arith.mulf %103, %102 : vector<8x128xf32>
    %cst_37 = arith.constant -8.513300e-02 : f32
    %105 = vector.broadcast %cst_37 : f32 to vector<8x128xf32>
    %106 = arith.addf %104, %105 : vector<8x128xf32>
    %107 = arith.mulf %106, %102 : vector<8x128xf32>
    %cst_38 = arith.constant 1.801410e-01 : f32
    %108 = vector.broadcast %cst_38 : f32 to vector<8x128xf32>
    %109 = arith.addf %107, %108 : vector<8x128xf32>
    %110 = arith.mulf %109, %102 : vector<8x128xf32>
    %cst_39 = arith.constant -0.330299497 : f32
    %111 = vector.broadcast %cst_39 : f32 to vector<8x128xf32>
    %112 = arith.addf %110, %111 : vector<8x128xf32>
    %113 = arith.mulf %112, %102 : vector<8x128xf32>
    %cst_40 = arith.constant 9.998660e-01 : f32
    %114 = vector.broadcast %cst_40 : f32 to vector<8x128xf32>
    %115 = arith.addf %113, %114 : vector<8x128xf32>
    %116 = arith.mulf %115, %101 : vector<8x128xf32>
    %117 = arith.cmpf ogt, %92, %93 : vector<8x128xf32>
    %cst_41 = arith.constant 1.57079637 : f32
    %118 = vector.broadcast %cst_41 : f32 to vector<8x128xf32>
    %119 = arith.subf %118, %116 : vector<8x128xf32>
    %120 = arith.select %117, %119, %116 : vector<8x128xi1>, vector<8x128xf32>
    %cst_42 = arith.constant 0.000000e+00 : f32
    %121 = vector.broadcast %cst_42 : f32 to vector<8x128xf32>
    %122 = arith.cmpf oge, %88, %121 : vector<8x128xf32>
    %cst_43 = arith.constant 3.14159274 : f32
    %123 = vector.broadcast %cst_43 : f32 to vector<8x128xf32>
    %124 = arith.subf %123, %120 : vector<8x128xf32>
    %125 = arith.select %122, %120, %124 : vector<8x128xi1>, vector<8x128xf32>
    %cst_44 = arith.constant 0.000000e+00 : f32
    %126 = vector.broadcast %cst_44 : f32 to vector<8x128xf32>
    %127 = arith.cmpf oge, %91, %126 : vector<8x128xf32>
    %cst_45 = arith.constant 0.000000e+00 : f32
    %128 = vector.broadcast %cst_45 : f32 to vector<8x128xf32>
    %129 = arith.subf %128, %125 : vector<8x128xf32>
    %130 = arith.select %127, %125, %129 : vector<8x128xi1>, vector<8x128xf32>
    %131 = vector.broadcast %24 : f32 to vector<8x128xf32>
    %132 = arith.subf %130, %131 : vector<8x128xf32>
    %cst_46 = arith.constant 0.000000e+00 : f32
    %133 = vector.broadcast %cst_46 : f32 to vector<8x128xf32>
    %134 = arith.cmpf oge, %132, %133 : vector<8x128xf32>
    %cst_47 = arith.constant 6.28318548 : f32
    %135 = vector.broadcast %cst_47 : f32 to vector<8x128xf32>
    %136 = arith.addf %132, %135 : vector<8x128xf32>
    %137 = arith.select %134, %132, %136 : vector<8x128xi1>, vector<8x128xf32>
    %138 = vector.broadcast %0 : f32 to vector<8x128xf32>
    %139 = arith.mulf %138, %137 : vector<8x128xf32>
    %140 = arith.addf %70, %139 : vector<8x128xf32>
    %141 = vector.broadcast %0 : f32 to vector<8x128xf32>
    %142 = arith.mulf %141, %85 : vector<8x128xf32>
    %143 = arith.addf %71, %142 : vector<8x128xf32>
    %144 = vector.broadcast %9 : f32 to vector<8x128xf32>
    %145 = arith.subf %68, %144 : vector<8x128xf32>
    %146 = vector.broadcast %17 : f32 to vector<8x128xf32>
    %147 = arith.subf %69, %146 : vector<8x128xf32>
    %148 = arith.mulf %145, %145 : vector<8x128xf32>
    %149 = arith.mulf %147, %147 : vector<8x128xf32>
    %150 = arith.addf %148, %149 : vector<8x128xf32>
    %151 = tpu.reciprocal %150 {approx = true} : vector<8x128xf32> -> vector<8x128xf32>
    %152 = arith.mulf %150, %151 : vector<8x128xf32>
    %cst_48 = arith.constant 2.000000e+00 : f32
    %153 = vector.broadcast %cst_48 : f32 to vector<8x128xf32>
    %154 = arith.subf %153, %152 : vector<8x128xf32>
    %155 = arith.mulf %151, %154 : vector<8x128xf32>
    %156 = vector.broadcast %39 : f32 to vector<8x128xf32>
    %157 = arith.mulf %156, %155 : vector<8x128xf32>
    %158 = arith.mulf %157, %145 : vector<8x128xf32>
    %159 = vector.broadcast %9 : f32 to vector<8x128xf32>
    %160 = arith.subf %158, %159 : vector<8x128xf32>
    %161 = arith.mulf %157, %147 : vector<8x128xf32>
    %162 = vector.broadcast %17 : f32 to vector<8x128xf32>
    %163 = arith.subf %161, %162 : vector<8x128xf32>
    %164 = math.absf %163 : vector<8x128xf32>
    %165 = math.absf %160 : vector<8x128xf32>
    %166 = arith.minimumf %164, %165 : vector<8x128xf32>
    %167 = arith.maximumf %164, %165 : vector<8x128xf32>
    %168 = tpu.reciprocal %167 {approx = true} : vector<8x128xf32> -> vector<8x128xf32>
    %169 = arith.mulf %167, %168 : vector<8x128xf32>
    %cst_49 = arith.constant 2.000000e+00 : f32
    %170 = vector.broadcast %cst_49 : f32 to vector<8x128xf32>
    %171 = arith.subf %170, %169 : vector<8x128xf32>
    %172 = arith.mulf %168, %171 : vector<8x128xf32>
    %173 = arith.mulf %166, %172 : vector<8x128xf32>
    %174 = arith.mulf %173, %173 : vector<8x128xf32>
    %cst_50 = arith.constant 2.083510e-02 : f32
    %175 = vector.broadcast %cst_50 : f32 to vector<8x128xf32>
    %176 = arith.mulf %175, %174 : vector<8x128xf32>
    %cst_51 = arith.constant -8.513300e-02 : f32
    %177 = vector.broadcast %cst_51 : f32 to vector<8x128xf32>
    %178 = arith.addf %176, %177 : vector<8x128xf32>
    %179 = arith.mulf %178, %174 : vector<8x128xf32>
    %cst_52 = arith.constant 1.801410e-01 : f32
    %180 = vector.broadcast %cst_52 : f32 to vector<8x128xf32>
    %181 = arith.addf %179, %180 : vector<8x128xf32>
    %182 = arith.mulf %181, %174 : vector<8x128xf32>
    %cst_53 = arith.constant -0.330299497 : f32
    %183 = vector.broadcast %cst_53 : f32 to vector<8x128xf32>
    %184 = arith.addf %182, %183 : vector<8x128xf32>
    %185 = arith.mulf %184, %174 : vector<8x128xf32>
    %cst_54 = arith.constant 9.998660e-01 : f32
    %186 = vector.broadcast %cst_54 : f32 to vector<8x128xf32>
    %187 = arith.addf %185, %186 : vector<8x128xf32>
    %188 = arith.mulf %187, %173 : vector<8x128xf32>
    %189 = arith.cmpf ogt, %164, %165 : vector<8x128xf32>
    %cst_55 = arith.constant 1.57079637 : f32
    %190 = vector.broadcast %cst_55 : f32 to vector<8x128xf32>
    %191 = arith.subf %190, %188 : vector<8x128xf32>
    %192 = arith.select %189, %191, %188 : vector<8x128xi1>, vector<8x128xf32>
    %cst_56 = arith.constant 0.000000e+00 : f32
    %193 = vector.broadcast %cst_56 : f32 to vector<8x128xf32>
    %194 = arith.cmpf oge, %160, %193 : vector<8x128xf32>
    %cst_57 = arith.constant 3.14159274 : f32
    %195 = vector.broadcast %cst_57 : f32 to vector<8x128xf32>
    %196 = arith.subf %195, %192 : vector<8x128xf32>
    %197 = arith.select %194, %192, %196 : vector<8x128xi1>, vector<8x128xf32>
    %cst_58 = arith.constant 0.000000e+00 : f32
    %198 = vector.broadcast %cst_58 : f32 to vector<8x128xf32>
    %199 = arith.cmpf oge, %163, %198 : vector<8x128xf32>
    %cst_59 = arith.constant 0.000000e+00 : f32
    %200 = vector.broadcast %cst_59 : f32 to vector<8x128xf32>
    %201 = arith.subf %200, %197 : vector<8x128xf32>
    %202 = arith.select %199, %197, %201 : vector<8x128xi1>, vector<8x128xf32>
    %203 = vector.broadcast %25 : f32 to vector<8x128xf32>
    %204 = arith.subf %202, %203 : vector<8x128xf32>
    %cst_60 = arith.constant 0.000000e+00 : f32
    %205 = vector.broadcast %cst_60 : f32 to vector<8x128xf32>
    %206 = arith.cmpf oge, %204, %205 : vector<8x128xf32>
    %cst_61 = arith.constant 6.28318548 : f32
    %207 = vector.broadcast %cst_61 : f32 to vector<8x128xf32>
    %208 = arith.addf %204, %207 : vector<8x128xf32>
    %209 = arith.select %206, %204, %208 : vector<8x128xi1>, vector<8x128xf32>
    %210 = vector.broadcast %1 : f32 to vector<8x128xf32>
    %211 = arith.mulf %210, %209 : vector<8x128xf32>
    %212 = arith.addf %140, %211 : vector<8x128xf32>
    %213 = vector.broadcast %1 : f32 to vector<8x128xf32>
    %214 = arith.mulf %213, %157 : vector<8x128xf32>
    %215 = arith.addf %143, %214 : vector<8x128xf32>
    %216 = vector.broadcast %10 : f32 to vector<8x128xf32>
    %217 = arith.subf %68, %216 : vector<8x128xf32>
    %218 = vector.broadcast %18 : f32 to vector<8x128xf32>
    %219 = arith.subf %69, %218 : vector<8x128xf32>
    %220 = arith.mulf %217, %217 : vector<8x128xf32>
    %221 = arith.mulf %219, %219 : vector<8x128xf32>
    %222 = arith.addf %220, %221 : vector<8x128xf32>
    %223 = tpu.reciprocal %222 {approx = true} : vector<8x128xf32> -> vector<8x128xf32>
    %224 = arith.mulf %222, %223 : vector<8x128xf32>
    %cst_62 = arith.constant 2.000000e+00 : f32
    %225 = vector.broadcast %cst_62 : f32 to vector<8x128xf32>
    %226 = arith.subf %225, %224 : vector<8x128xf32>
    %227 = arith.mulf %223, %226 : vector<8x128xf32>
    %228 = vector.broadcast %43 : f32 to vector<8x128xf32>
    %229 = arith.mulf %228, %227 : vector<8x128xf32>
    %230 = arith.mulf %229, %217 : vector<8x128xf32>
    %231 = vector.broadcast %10 : f32 to vector<8x128xf32>
    %232 = arith.subf %230, %231 : vector<8x128xf32>
    %233 = arith.mulf %229, %219 : vector<8x128xf32>
    %234 = vector.broadcast %18 : f32 to vector<8x128xf32>
    %235 = arith.subf %233, %234 : vector<8x128xf32>
    %236 = math.absf %235 : vector<8x128xf32>
    %237 = math.absf %232 : vector<8x128xf32>
    %238 = arith.minimumf %236, %237 : vector<8x128xf32>
    %239 = arith.maximumf %236, %237 : vector<8x128xf32>
    %240 = tpu.reciprocal %239 {approx = true} : vector<8x128xf32> -> vector<8x128xf32>
    %241 = arith.mulf %239, %240 : vector<8x128xf32>
    %cst_63 = arith.constant 2.000000e+00 : f32
    %242 = vector.broadcast %cst_63 : f32 to vector<8x128xf32>
    %243 = arith.subf %242, %241 : vector<8x128xf32>
    %244 = arith.mulf %240, %243 : vector<8x128xf32>
    %245 = arith.mulf %238, %244 : vector<8x128xf32>
    %246 = arith.mulf %245, %245 : vector<8x128xf32>
    %cst_64 = arith.constant 2.083510e-02 : f32
    %247 = vector.broadcast %cst_64 : f32 to vector<8x128xf32>
    %248 = arith.mulf %247, %246 : vector<8x128xf32>
    %cst_65 = arith.constant -8.513300e-02 : f32
    %249 = vector.broadcast %cst_65 : f32 to vector<8x128xf32>
    %250 = arith.addf %248, %249 : vector<8x128xf32>
    %251 = arith.mulf %250, %246 : vector<8x128xf32>
    %cst_66 = arith.constant 1.801410e-01 : f32
    %252 = vector.broadcast %cst_66 : f32 to vector<8x128xf32>
    %253 = arith.addf %251, %252 : vector<8x128xf32>
    %254 = arith.mulf %253, %246 : vector<8x128xf32>
    %cst_67 = arith.constant -0.330299497 : f32
    %255 = vector.broadcast %cst_67 : f32 to vector<8x128xf32>
    %256 = arith.addf %254, %255 : vector<8x128xf32>
    %257 = arith.mulf %256, %246 : vector<8x128xf32>
    %cst_68 = arith.constant 9.998660e-01 : f32
    %258 = vector.broadcast %cst_68 : f32 to vector<8x128xf32>
    %259 = arith.addf %257, %258 : vector<8x128xf32>
    %260 = arith.mulf %259, %245 : vector<8x128xf32>
    %261 = arith.cmpf ogt, %236, %237 : vector<8x128xf32>
    %cst_69 = arith.constant 1.57079637 : f32
    %262 = vector.broadcast %cst_69 : f32 to vector<8x128xf32>
    %263 = arith.subf %262, %260 : vector<8x128xf32>
    %264 = arith.select %261, %263, %260 : vector<8x128xi1>, vector<8x128xf32>
    %cst_70 = arith.constant 0.000000e+00 : f32
    %265 = vector.broadcast %cst_70 : f32 to vector<8x128xf32>
    %266 = arith.cmpf oge, %232, %265 : vector<8x128xf32>
    %cst_71 = arith.constant 3.14159274 : f32
    %267 = vector.broadcast %cst_71 : f32 to vector<8x128xf32>
    %268 = arith.subf %267, %264 : vector<8x128xf32>
    %269 = arith.select %266, %264, %268 : vector<8x128xi1>, vector<8x128xf32>
    %cst_72 = arith.constant 0.000000e+00 : f32
    %270 = vector.broadcast %cst_72 : f32 to vector<8x128xf32>
    %271 = arith.cmpf oge, %235, %270 : vector<8x128xf32>
    %cst_73 = arith.constant 0.000000e+00 : f32
    %272 = vector.broadcast %cst_73 : f32 to vector<8x128xf32>
    %273 = arith.subf %272, %269 : vector<8x128xf32>
    %274 = arith.select %271, %269, %273 : vector<8x128xi1>, vector<8x128xf32>
    %275 = vector.broadcast %26 : f32 to vector<8x128xf32>
    %276 = arith.subf %274, %275 : vector<8x128xf32>
    %cst_74 = arith.constant 0.000000e+00 : f32
    %277 = vector.broadcast %cst_74 : f32 to vector<8x128xf32>
    %278 = arith.cmpf oge, %276, %277 : vector<8x128xf32>
    %cst_75 = arith.constant 6.28318548 : f32
    %279 = vector.broadcast %cst_75 : f32 to vector<8x128xf32>
    %280 = arith.addf %276, %279 : vector<8x128xf32>
    %281 = arith.select %278, %276, %280 : vector<8x128xi1>, vector<8x128xf32>
    %282 = vector.broadcast %2 : f32 to vector<8x128xf32>
    %283 = arith.mulf %282, %281 : vector<8x128xf32>
    %284 = arith.addf %212, %283 : vector<8x128xf32>
    %285 = vector.broadcast %2 : f32 to vector<8x128xf32>
    %286 = arith.mulf %285, %229 : vector<8x128xf32>
    %287 = arith.addf %215, %286 : vector<8x128xf32>
    %288 = vector.broadcast %11 : f32 to vector<8x128xf32>
    %289 = arith.subf %68, %288 : vector<8x128xf32>
    %290 = vector.broadcast %19 : f32 to vector<8x128xf32>
    %291 = arith.subf %69, %290 : vector<8x128xf32>
    %292 = arith.mulf %289, %289 : vector<8x128xf32>
    %293 = arith.mulf %291, %291 : vector<8x128xf32>
    %294 = arith.addf %292, %293 : vector<8x128xf32>
    %295 = tpu.reciprocal %294 {approx = true} : vector<8x128xf32> -> vector<8x128xf32>
    %296 = arith.mulf %294, %295 : vector<8x128xf32>
    %cst_76 = arith.constant 2.000000e+00 : f32
    %297 = vector.broadcast %cst_76 : f32 to vector<8x128xf32>
    %298 = arith.subf %297, %296 : vector<8x128xf32>
    %299 = arith.mulf %295, %298 : vector<8x128xf32>
    %300 = vector.broadcast %47 : f32 to vector<8x128xf32>
    %301 = arith.mulf %300, %299 : vector<8x128xf32>
    %302 = arith.mulf %301, %289 : vector<8x128xf32>
    %303 = vector.broadcast %11 : f32 to vector<8x128xf32>
    %304 = arith.subf %302, %303 : vector<8x128xf32>
    %305 = arith.mulf %301, %291 : vector<8x128xf32>
    %306 = vector.broadcast %19 : f32 to vector<8x128xf32>
    %307 = arith.subf %305, %306 : vector<8x128xf32>
    %308 = math.absf %307 : vector<8x128xf32>
    %309 = math.absf %304 : vector<8x128xf32>
    %310 = arith.minimumf %308, %309 : vector<8x128xf32>
    %311 = arith.maximumf %308, %309 : vector<8x128xf32>
    %312 = tpu.reciprocal %311 {approx = true} : vector<8x128xf32> -> vector<8x128xf32>
    %313 = arith.mulf %311, %312 : vector<8x128xf32>
    %cst_77 = arith.constant 2.000000e+00 : f32
    %314 = vector.broadcast %cst_77 : f32 to vector<8x128xf32>
    %315 = arith.subf %314, %313 : vector<8x128xf32>
    %316 = arith.mulf %312, %315 : vector<8x128xf32>
    %317 = arith.mulf %310, %316 : vector<8x128xf32>
    %318 = arith.mulf %317, %317 : vector<8x128xf32>
    %cst_78 = arith.constant 2.083510e-02 : f32
    %319 = vector.broadcast %cst_78 : f32 to vector<8x128xf32>
    %320 = arith.mulf %319, %318 : vector<8x128xf32>
    %cst_79 = arith.constant -8.513300e-02 : f32
    %321 = vector.broadcast %cst_79 : f32 to vector<8x128xf32>
    %322 = arith.addf %320, %321 : vector<8x128xf32>
    %323 = arith.mulf %322, %318 : vector<8x128xf32>
    %cst_80 = arith.constant 1.801410e-01 : f32
    %324 = vector.broadcast %cst_80 : f32 to vector<8x128xf32>
    %325 = arith.addf %323, %324 : vector<8x128xf32>
    %326 = arith.mulf %325, %318 : vector<8x128xf32>
    %cst_81 = arith.constant -0.330299497 : f32
    %327 = vector.broadcast %cst_81 : f32 to vector<8x128xf32>
    %328 = arith.addf %326, %327 : vector<8x128xf32>
    %329 = arith.mulf %328, %318 : vector<8x128xf32>
    %cst_82 = arith.constant 9.998660e-01 : f32
    %330 = vector.broadcast %cst_82 : f32 to vector<8x128xf32>
    %331 = arith.addf %329, %330 : vector<8x128xf32>
    %332 = arith.mulf %331, %317 : vector<8x128xf32>
    %333 = arith.cmpf ogt, %308, %309 : vector<8x128xf32>
    %cst_83 = arith.constant 1.57079637 : f32
    %334 = vector.broadcast %cst_83 : f32 to vector<8x128xf32>
    %335 = arith.subf %334, %332 : vector<8x128xf32>
    %336 = arith.select %333, %335, %332 : vector<8x128xi1>, vector<8x128xf32>
    %cst_84 = arith.constant 0.000000e+00 : f32
    %337 = vector.broadcast %cst_84 : f32 to vector<8x128xf32>
    %338 = arith.cmpf oge, %304, %337 : vector<8x128xf32>
    %cst_85 = arith.constant 3.14159274 : f32
    %339 = vector.broadcast %cst_85 : f32 to vector<8x128xf32>
    %340 = arith.subf %339, %336 : vector<8x128xf32>
    %341 = arith.select %338, %336, %340 : vector<8x128xi1>, vector<8x128xf32>
    %cst_86 = arith.constant 0.000000e+00 : f32
    %342 = vector.broadcast %cst_86 : f32 to vector<8x128xf32>
    %343 = arith.cmpf oge, %307, %342 : vector<8x128xf32>
    %cst_87 = arith.constant 0.000000e+00 : f32
    %344 = vector.broadcast %cst_87 : f32 to vector<8x128xf32>
    %345 = arith.subf %344, %341 : vector<8x128xf32>
    %346 = arith.select %343, %341, %345 : vector<8x128xi1>, vector<8x128xf32>
    %347 = vector.broadcast %27 : f32 to vector<8x128xf32>
    %348 = arith.subf %346, %347 : vector<8x128xf32>
    %cst_88 = arith.constant 0.000000e+00 : f32
    %349 = vector.broadcast %cst_88 : f32 to vector<8x128xf32>
    %350 = arith.cmpf oge, %348, %349 : vector<8x128xf32>
    %cst_89 = arith.constant 6.28318548 : f32
    %351 = vector.broadcast %cst_89 : f32 to vector<8x128xf32>
    %352 = arith.addf %348, %351 : vector<8x128xf32>
    %353 = arith.select %350, %348, %352 : vector<8x128xi1>, vector<8x128xf32>
    %354 = vector.broadcast %3 : f32 to vector<8x128xf32>
    %355 = arith.mulf %354, %353 : vector<8x128xf32>
    %356 = arith.addf %284, %355 : vector<8x128xf32>
    %357 = vector.broadcast %3 : f32 to vector<8x128xf32>
    %358 = arith.mulf %357, %301 : vector<8x128xf32>
    %359 = arith.addf %287, %358 : vector<8x128xf32>
    %360 = vector.broadcast %12 : f32 to vector<8x128xf32>
    %361 = arith.subf %68, %360 : vector<8x128xf32>
    %362 = vector.broadcast %20 : f32 to vector<8x128xf32>
    %363 = arith.subf %69, %362 : vector<8x128xf32>
    %364 = arith.mulf %361, %361 : vector<8x128xf32>
    %365 = arith.mulf %363, %363 : vector<8x128xf32>
    %366 = arith.addf %364, %365 : vector<8x128xf32>
    %367 = tpu.reciprocal %366 {approx = true} : vector<8x128xf32> -> vector<8x128xf32>
    %368 = arith.mulf %366, %367 : vector<8x128xf32>
    %cst_90 = arith.constant 2.000000e+00 : f32
    %369 = vector.broadcast %cst_90 : f32 to vector<8x128xf32>
    %370 = arith.subf %369, %368 : vector<8x128xf32>
    %371 = arith.mulf %367, %370 : vector<8x128xf32>
    %372 = vector.broadcast %51 : f32 to vector<8x128xf32>
    %373 = arith.mulf %372, %371 : vector<8x128xf32>
    %374 = arith.mulf %373, %361 : vector<8x128xf32>
    %375 = vector.broadcast %12 : f32 to vector<8x128xf32>
    %376 = arith.subf %374, %375 : vector<8x128xf32>
    %377 = arith.mulf %373, %363 : vector<8x128xf32>
    %378 = vector.broadcast %20 : f32 to vector<8x128xf32>
    %379 = arith.subf %377, %378 : vector<8x128xf32>
    %380 = math.absf %379 : vector<8x128xf32>
    %381 = math.absf %376 : vector<8x128xf32>
    %382 = arith.minimumf %380, %381 : vector<8x128xf32>
    %383 = arith.maximumf %380, %381 : vector<8x128xf32>
    %384 = tpu.reciprocal %383 {approx = true} : vector<8x128xf32> -> vector<8x128xf32>
    %385 = arith.mulf %383, %384 : vector<8x128xf32>
    %cst_91 = arith.constant 2.000000e+00 : f32
    %386 = vector.broadcast %cst_91 : f32 to vector<8x128xf32>
    %387 = arith.subf %386, %385 : vector<8x128xf32>
    %388 = arith.mulf %384, %387 : vector<8x128xf32>
    %389 = arith.mulf %382, %388 : vector<8x128xf32>
    %390 = arith.mulf %389, %389 : vector<8x128xf32>
    %cst_92 = arith.constant 2.083510e-02 : f32
    %391 = vector.broadcast %cst_92 : f32 to vector<8x128xf32>
    %392 = arith.mulf %391, %390 : vector<8x128xf32>
    %cst_93 = arith.constant -8.513300e-02 : f32
    %393 = vector.broadcast %cst_93 : f32 to vector<8x128xf32>
    %394 = arith.addf %392, %393 : vector<8x128xf32>
    %395 = arith.mulf %394, %390 : vector<8x128xf32>
    %cst_94 = arith.constant 1.801410e-01 : f32
    %396 = vector.broadcast %cst_94 : f32 to vector<8x128xf32>
    %397 = arith.addf %395, %396 : vector<8x128xf32>
    %398 = arith.mulf %397, %390 : vector<8x128xf32>
    %cst_95 = arith.constant -0.330299497 : f32
    %399 = vector.broadcast %cst_95 : f32 to vector<8x128xf32>
    %400 = arith.addf %398, %399 : vector<8x128xf32>
    %401 = arith.mulf %400, %390 : vector<8x128xf32>
    %cst_96 = arith.constant 9.998660e-01 : f32
    %402 = vector.broadcast %cst_96 : f32 to vector<8x128xf32>
    %403 = arith.addf %401, %402 : vector<8x128xf32>
    %404 = arith.mulf %403, %389 : vector<8x128xf32>
    %405 = arith.cmpf ogt, %380, %381 : vector<8x128xf32>
    %cst_97 = arith.constant 1.57079637 : f32
    %406 = vector.broadcast %cst_97 : f32 to vector<8x128xf32>
    %407 = arith.subf %406, %404 : vector<8x128xf32>
    %408 = arith.select %405, %407, %404 : vector<8x128xi1>, vector<8x128xf32>
    %cst_98 = arith.constant 0.000000e+00 : f32
    %409 = vector.broadcast %cst_98 : f32 to vector<8x128xf32>
    %410 = arith.cmpf oge, %376, %409 : vector<8x128xf32>
    %cst_99 = arith.constant 3.14159274 : f32
    %411 = vector.broadcast %cst_99 : f32 to vector<8x128xf32>
    %412 = arith.subf %411, %408 : vector<8x128xf32>
    %413 = arith.select %410, %408, %412 : vector<8x128xi1>, vector<8x128xf32>
    %cst_100 = arith.constant 0.000000e+00 : f32
    %414 = vector.broadcast %cst_100 : f32 to vector<8x128xf32>
    %415 = arith.cmpf oge, %379, %414 : vector<8x128xf32>
    %cst_101 = arith.constant 0.000000e+00 : f32
    %416 = vector.broadcast %cst_101 : f32 to vector<8x128xf32>
    %417 = arith.subf %416, %413 : vector<8x128xf32>
    %418 = arith.select %415, %413, %417 : vector<8x128xi1>, vector<8x128xf32>
    %419 = vector.broadcast %28 : f32 to vector<8x128xf32>
    %420 = arith.subf %418, %419 : vector<8x128xf32>
    %cst_102 = arith.constant 0.000000e+00 : f32
    %421 = vector.broadcast %cst_102 : f32 to vector<8x128xf32>
    %422 = arith.cmpf oge, %420, %421 : vector<8x128xf32>
    %cst_103 = arith.constant 6.28318548 : f32
    %423 = vector.broadcast %cst_103 : f32 to vector<8x128xf32>
    %424 = arith.addf %420, %423 : vector<8x128xf32>
    %425 = arith.select %422, %420, %424 : vector<8x128xi1>, vector<8x128xf32>
    %426 = vector.broadcast %4 : f32 to vector<8x128xf32>
    %427 = arith.mulf %426, %425 : vector<8x128xf32>
    %428 = arith.addf %356, %427 : vector<8x128xf32>
    %429 = vector.broadcast %4 : f32 to vector<8x128xf32>
    %430 = arith.mulf %429, %373 : vector<8x128xf32>
    %431 = arith.addf %359, %430 : vector<8x128xf32>
    %432 = vector.broadcast %13 : f32 to vector<8x128xf32>
    %433 = arith.subf %68, %432 : vector<8x128xf32>
    %434 = vector.broadcast %21 : f32 to vector<8x128xf32>
    %435 = arith.subf %69, %434 : vector<8x128xf32>
    %436 = arith.mulf %433, %433 : vector<8x128xf32>
    %437 = arith.mulf %435, %435 : vector<8x128xf32>
    %438 = arith.addf %436, %437 : vector<8x128xf32>
    %439 = tpu.reciprocal %438 {approx = true} : vector<8x128xf32> -> vector<8x128xf32>
    %440 = arith.mulf %438, %439 : vector<8x128xf32>
    %cst_104 = arith.constant 2.000000e+00 : f32
    %441 = vector.broadcast %cst_104 : f32 to vector<8x128xf32>
    %442 = arith.subf %441, %440 : vector<8x128xf32>
    %443 = arith.mulf %439, %442 : vector<8x128xf32>
    %444 = vector.broadcast %55 : f32 to vector<8x128xf32>
    %445 = arith.mulf %444, %443 : vector<8x128xf32>
    %446 = arith.mulf %445, %433 : vector<8x128xf32>
    %447 = vector.broadcast %13 : f32 to vector<8x128xf32>
    %448 = arith.subf %446, %447 : vector<8x128xf32>
    %449 = arith.mulf %445, %435 : vector<8x128xf32>
    %450 = vector.broadcast %21 : f32 to vector<8x128xf32>
    %451 = arith.subf %449, %450 : vector<8x128xf32>
    %452 = math.absf %451 : vector<8x128xf32>
    %453 = math.absf %448 : vector<8x128xf32>
    %454 = arith.minimumf %452, %453 : vector<8x128xf32>
    %455 = arith.maximumf %452, %453 : vector<8x128xf32>
    %456 = tpu.reciprocal %455 {approx = true} : vector<8x128xf32> -> vector<8x128xf32>
    %457 = arith.mulf %455, %456 : vector<8x128xf32>
    %cst_105 = arith.constant 2.000000e+00 : f32
    %458 = vector.broadcast %cst_105 : f32 to vector<8x128xf32>
    %459 = arith.subf %458, %457 : vector<8x128xf32>
    %460 = arith.mulf %456, %459 : vector<8x128xf32>
    %461 = arith.mulf %454, %460 : vector<8x128xf32>
    %462 = arith.mulf %461, %461 : vector<8x128xf32>
    %cst_106 = arith.constant 2.083510e-02 : f32
    %463 = vector.broadcast %cst_106 : f32 to vector<8x128xf32>
    %464 = arith.mulf %463, %462 : vector<8x128xf32>
    %cst_107 = arith.constant -8.513300e-02 : f32
    %465 = vector.broadcast %cst_107 : f32 to vector<8x128xf32>
    %466 = arith.addf %464, %465 : vector<8x128xf32>
    %467 = arith.mulf %466, %462 : vector<8x128xf32>
    %cst_108 = arith.constant 1.801410e-01 : f32
    %468 = vector.broadcast %cst_108 : f32 to vector<8x128xf32>
    %469 = arith.addf %467, %468 : vector<8x128xf32>
    %470 = arith.mulf %469, %462 : vector<8x128xf32>
    %cst_109 = arith.constant -0.330299497 : f32
    %471 = vector.broadcast %cst_109 : f32 to vector<8x128xf32>
    %472 = arith.addf %470, %471 : vector<8x128xf32>
    %473 = arith.mulf %472, %462 : vector<8x128xf32>
    %cst_110 = arith.constant 9.998660e-01 : f32
    %474 = vector.broadcast %cst_110 : f32 to vector<8x128xf32>
    %475 = arith.addf %473, %474 : vector<8x128xf32>
    %476 = arith.mulf %475, %461 : vector<8x128xf32>
    %477 = arith.cmpf ogt, %452, %453 : vector<8x128xf32>
    %cst_111 = arith.constant 1.57079637 : f32
    %478 = vector.broadcast %cst_111 : f32 to vector<8x128xf32>
    %479 = arith.subf %478, %476 : vector<8x128xf32>
    %480 = arith.select %477, %479, %476 : vector<8x128xi1>, vector<8x128xf32>
    %cst_112 = arith.constant 0.000000e+00 : f32
    %481 = vector.broadcast %cst_112 : f32 to vector<8x128xf32>
    %482 = arith.cmpf oge, %448, %481 : vector<8x128xf32>
    %cst_113 = arith.constant 3.14159274 : f32
    %483 = vector.broadcast %cst_113 : f32 to vector<8x128xf32>
    %484 = arith.subf %483, %480 : vector<8x128xf32>
    %485 = arith.select %482, %480, %484 : vector<8x128xi1>, vector<8x128xf32>
    %cst_114 = arith.constant 0.000000e+00 : f32
    %486 = vector.broadcast %cst_114 : f32 to vector<8x128xf32>
    %487 = arith.cmpf oge, %451, %486 : vector<8x128xf32>
    %cst_115 = arith.constant 0.000000e+00 : f32
    %488 = vector.broadcast %cst_115 : f32 to vector<8x128xf32>
    %489 = arith.subf %488, %485 : vector<8x128xf32>
    %490 = arith.select %487, %485, %489 : vector<8x128xi1>, vector<8x128xf32>
    %491 = vector.broadcast %29 : f32 to vector<8x128xf32>
    %492 = arith.subf %490, %491 : vector<8x128xf32>
    %cst_116 = arith.constant 0.000000e+00 : f32
    %493 = vector.broadcast %cst_116 : f32 to vector<8x128xf32>
    %494 = arith.cmpf oge, %492, %493 : vector<8x128xf32>
    %cst_117 = arith.constant 6.28318548 : f32
    %495 = vector.broadcast %cst_117 : f32 to vector<8x128xf32>
    %496 = arith.addf %492, %495 : vector<8x128xf32>
    %497 = arith.select %494, %492, %496 : vector<8x128xi1>, vector<8x128xf32>
    %498 = vector.broadcast %5 : f32 to vector<8x128xf32>
    %499 = arith.mulf %498, %497 : vector<8x128xf32>
    %500 = arith.addf %428, %499 : vector<8x128xf32>
    %501 = vector.broadcast %5 : f32 to vector<8x128xf32>
    %502 = arith.mulf %501, %445 : vector<8x128xf32>
    %503 = arith.addf %431, %502 : vector<8x128xf32>
    %504 = vector.broadcast %14 : f32 to vector<8x128xf32>
    %505 = arith.subf %68, %504 : vector<8x128xf32>
    %506 = vector.broadcast %22 : f32 to vector<8x128xf32>
    %507 = arith.subf %69, %506 : vector<8x128xf32>
    %508 = arith.mulf %505, %505 : vector<8x128xf32>
    %509 = arith.mulf %507, %507 : vector<8x128xf32>
    %510 = arith.addf %508, %509 : vector<8x128xf32>
    %511 = tpu.reciprocal %510 {approx = true} : vector<8x128xf32> -> vector<8x128xf32>
    %512 = arith.mulf %510, %511 : vector<8x128xf32>
    %cst_118 = arith.constant 2.000000e+00 : f32
    %513 = vector.broadcast %cst_118 : f32 to vector<8x128xf32>
    %514 = arith.subf %513, %512 : vector<8x128xf32>
    %515 = arith.mulf %511, %514 : vector<8x128xf32>
    %516 = vector.broadcast %59 : f32 to vector<8x128xf32>
    %517 = arith.mulf %516, %515 : vector<8x128xf32>
    %518 = arith.mulf %517, %505 : vector<8x128xf32>
    %519 = vector.broadcast %14 : f32 to vector<8x128xf32>
    %520 = arith.subf %518, %519 : vector<8x128xf32>
    %521 = arith.mulf %517, %507 : vector<8x128xf32>
    %522 = vector.broadcast %22 : f32 to vector<8x128xf32>
    %523 = arith.subf %521, %522 : vector<8x128xf32>
    %524 = math.absf %523 : vector<8x128xf32>
    %525 = math.absf %520 : vector<8x128xf32>
    %526 = arith.minimumf %524, %525 : vector<8x128xf32>
    %527 = arith.maximumf %524, %525 : vector<8x128xf32>
    %528 = tpu.reciprocal %527 {approx = true} : vector<8x128xf32> -> vector<8x128xf32>
    %529 = arith.mulf %527, %528 : vector<8x128xf32>
    %cst_119 = arith.constant 2.000000e+00 : f32
    %530 = vector.broadcast %cst_119 : f32 to vector<8x128xf32>
    %531 = arith.subf %530, %529 : vector<8x128xf32>
    %532 = arith.mulf %528, %531 : vector<8x128xf32>
    %533 = arith.mulf %526, %532 : vector<8x128xf32>
    %534 = arith.mulf %533, %533 : vector<8x128xf32>
    %cst_120 = arith.constant 2.083510e-02 : f32
    %535 = vector.broadcast %cst_120 : f32 to vector<8x128xf32>
    %536 = arith.mulf %535, %534 : vector<8x128xf32>
    %cst_121 = arith.constant -8.513300e-02 : f32
    %537 = vector.broadcast %cst_121 : f32 to vector<8x128xf32>
    %538 = arith.addf %536, %537 : vector<8x128xf32>
    %539 = arith.mulf %538, %534 : vector<8x128xf32>
    %cst_122 = arith.constant 1.801410e-01 : f32
    %540 = vector.broadcast %cst_122 : f32 to vector<8x128xf32>
    %541 = arith.addf %539, %540 : vector<8x128xf32>
    %542 = arith.mulf %541, %534 : vector<8x128xf32>
    %cst_123 = arith.constant -0.330299497 : f32
    %543 = vector.broadcast %cst_123 : f32 to vector<8x128xf32>
    %544 = arith.addf %542, %543 : vector<8x128xf32>
    %545 = arith.mulf %544, %534 : vector<8x128xf32>
    %cst_124 = arith.constant 9.998660e-01 : f32
    %546 = vector.broadcast %cst_124 : f32 to vector<8x128xf32>
    %547 = arith.addf %545, %546 : vector<8x128xf32>
    %548 = arith.mulf %547, %533 : vector<8x128xf32>
    %549 = arith.cmpf ogt, %524, %525 : vector<8x128xf32>
    %cst_125 = arith.constant 1.57079637 : f32
    %550 = vector.broadcast %cst_125 : f32 to vector<8x128xf32>
    %551 = arith.subf %550, %548 : vector<8x128xf32>
    %552 = arith.select %549, %551, %548 : vector<8x128xi1>, vector<8x128xf32>
    %cst_126 = arith.constant 0.000000e+00 : f32
    %553 = vector.broadcast %cst_126 : f32 to vector<8x128xf32>
    %554 = arith.cmpf oge, %520, %553 : vector<8x128xf32>
    %cst_127 = arith.constant 3.14159274 : f32
    %555 = vector.broadcast %cst_127 : f32 to vector<8x128xf32>
    %556 = arith.subf %555, %552 : vector<8x128xf32>
    %557 = arith.select %554, %552, %556 : vector<8x128xi1>, vector<8x128xf32>
    %cst_128 = arith.constant 0.000000e+00 : f32
    %558 = vector.broadcast %cst_128 : f32 to vector<8x128xf32>
    %559 = arith.cmpf oge, %523, %558 : vector<8x128xf32>
    %cst_129 = arith.constant 0.000000e+00 : f32
    %560 = vector.broadcast %cst_129 : f32 to vector<8x128xf32>
    %561 = arith.subf %560, %557 : vector<8x128xf32>
    %562 = arith.select %559, %557, %561 : vector<8x128xi1>, vector<8x128xf32>
    %563 = vector.broadcast %30 : f32 to vector<8x128xf32>
    %564 = arith.subf %562, %563 : vector<8x128xf32>
    %cst_130 = arith.constant 0.000000e+00 : f32
    %565 = vector.broadcast %cst_130 : f32 to vector<8x128xf32>
    %566 = arith.cmpf oge, %564, %565 : vector<8x128xf32>
    %cst_131 = arith.constant 6.28318548 : f32
    %567 = vector.broadcast %cst_131 : f32 to vector<8x128xf32>
    %568 = arith.addf %564, %567 : vector<8x128xf32>
    %569 = arith.select %566, %564, %568 : vector<8x128xi1>, vector<8x128xf32>
    %570 = vector.broadcast %6 : f32 to vector<8x128xf32>
    %571 = arith.mulf %570, %569 : vector<8x128xf32>
    %572 = arith.addf %500, %571 : vector<8x128xf32>
    %573 = vector.broadcast %6 : f32 to vector<8x128xf32>
    %574 = arith.mulf %573, %517 : vector<8x128xf32>
    %575 = arith.addf %503, %574 : vector<8x128xf32>
    %576 = vector.broadcast %15 : f32 to vector<8x128xf32>
    %577 = arith.subf %68, %576 : vector<8x128xf32>
    %578 = vector.broadcast %23 : f32 to vector<8x128xf32>
    %579 = arith.subf %69, %578 : vector<8x128xf32>
    %580 = arith.mulf %577, %577 : vector<8x128xf32>
    %581 = arith.mulf %579, %579 : vector<8x128xf32>
    %582 = arith.addf %580, %581 : vector<8x128xf32>
    %583 = tpu.reciprocal %582 {approx = true} : vector<8x128xf32> -> vector<8x128xf32>
    %584 = arith.mulf %582, %583 : vector<8x128xf32>
    %cst_132 = arith.constant 2.000000e+00 : f32
    %585 = vector.broadcast %cst_132 : f32 to vector<8x128xf32>
    %586 = arith.subf %585, %584 : vector<8x128xf32>
    %587 = arith.mulf %583, %586 : vector<8x128xf32>
    %588 = vector.broadcast %63 : f32 to vector<8x128xf32>
    %589 = arith.mulf %588, %587 : vector<8x128xf32>
    %590 = arith.mulf %589, %577 : vector<8x128xf32>
    %591 = vector.broadcast %15 : f32 to vector<8x128xf32>
    %592 = arith.subf %590, %591 : vector<8x128xf32>
    %593 = arith.mulf %589, %579 : vector<8x128xf32>
    %594 = vector.broadcast %23 : f32 to vector<8x128xf32>
    %595 = arith.subf %593, %594 : vector<8x128xf32>
    %596 = math.absf %595 : vector<8x128xf32>
    %597 = math.absf %592 : vector<8x128xf32>
    %598 = arith.minimumf %596, %597 : vector<8x128xf32>
    %599 = arith.maximumf %596, %597 : vector<8x128xf32>
    %600 = tpu.reciprocal %599 {approx = true} : vector<8x128xf32> -> vector<8x128xf32>
    %601 = arith.mulf %599, %600 : vector<8x128xf32>
    %cst_133 = arith.constant 2.000000e+00 : f32
    %602 = vector.broadcast %cst_133 : f32 to vector<8x128xf32>
    %603 = arith.subf %602, %601 : vector<8x128xf32>
    %604 = arith.mulf %600, %603 : vector<8x128xf32>
    %605 = arith.mulf %598, %604 : vector<8x128xf32>
    %606 = arith.mulf %605, %605 : vector<8x128xf32>
    %cst_134 = arith.constant 2.083510e-02 : f32
    %607 = vector.broadcast %cst_134 : f32 to vector<8x128xf32>
    %608 = arith.mulf %607, %606 : vector<8x128xf32>
    %cst_135 = arith.constant -8.513300e-02 : f32
    %609 = vector.broadcast %cst_135 : f32 to vector<8x128xf32>
    %610 = arith.addf %608, %609 : vector<8x128xf32>
    %611 = arith.mulf %610, %606 : vector<8x128xf32>
    %cst_136 = arith.constant 1.801410e-01 : f32
    %612 = vector.broadcast %cst_136 : f32 to vector<8x128xf32>
    %613 = arith.addf %611, %612 : vector<8x128xf32>
    %614 = arith.mulf %613, %606 : vector<8x128xf32>
    %cst_137 = arith.constant -0.330299497 : f32
    %615 = vector.broadcast %cst_137 : f32 to vector<8x128xf32>
    %616 = arith.addf %614, %615 : vector<8x128xf32>
    %617 = arith.mulf %616, %606 : vector<8x128xf32>
    %cst_138 = arith.constant 9.998660e-01 : f32
    %618 = vector.broadcast %cst_138 : f32 to vector<8x128xf32>
    %619 = arith.addf %617, %618 : vector<8x128xf32>
    %620 = arith.mulf %619, %605 : vector<8x128xf32>
    %621 = arith.cmpf ogt, %596, %597 : vector<8x128xf32>
    %cst_139 = arith.constant 1.57079637 : f32
    %622 = vector.broadcast %cst_139 : f32 to vector<8x128xf32>
    %623 = arith.subf %622, %620 : vector<8x128xf32>
    %624 = arith.select %621, %623, %620 : vector<8x128xi1>, vector<8x128xf32>
    %cst_140 = arith.constant 0.000000e+00 : f32
    %625 = vector.broadcast %cst_140 : f32 to vector<8x128xf32>
    %626 = arith.cmpf oge, %592, %625 : vector<8x128xf32>
    %cst_141 = arith.constant 3.14159274 : f32
    %627 = vector.broadcast %cst_141 : f32 to vector<8x128xf32>
    %628 = arith.subf %627, %624 : vector<8x128xf32>
    %629 = arith.select %626, %624, %628 : vector<8x128xi1>, vector<8x128xf32>
    %cst_142 = arith.constant 0.000000e+00 : f32
    %630 = vector.broadcast %cst_142 : f32 to vector<8x128xf32>
    %631 = arith.cmpf oge, %595, %630 : vector<8x128xf32>
    %cst_143 = arith.constant 0.000000e+00 : f32
    %632 = vector.broadcast %cst_143 : f32 to vector<8x128xf32>
    %633 = arith.subf %632, %629 : vector<8x128xf32>
    %634 = arith.select %631, %629, %633 : vector<8x128xi1>, vector<8x128xf32>
    %635 = vector.broadcast %31 : f32 to vector<8x128xf32>
    %636 = arith.subf %634, %635 : vector<8x128xf32>
    %cst_144 = arith.constant 0.000000e+00 : f32
    %637 = vector.broadcast %cst_144 : f32 to vector<8x128xf32>
    %638 = arith.cmpf oge, %636, %637 : vector<8x128xf32>
    %cst_145 = arith.constant 6.28318548 : f32
    %639 = vector.broadcast %cst_145 : f32 to vector<8x128xf32>
    %640 = arith.addf %636, %639 : vector<8x128xf32>
    %641 = arith.select %638, %636, %640 : vector<8x128xi1>, vector<8x128xf32>
    %642 = vector.broadcast %7 : f32 to vector<8x128xf32>
    %643 = arith.mulf %642, %641 : vector<8x128xf32>
    %644 = arith.addf %572, %643 : vector<8x128xf32>
    %645 = vector.broadcast %7 : f32 to vector<8x128xf32>
    %646 = arith.mulf %645, %589 : vector<8x128xf32>
    %647 = arith.addf %575, %646 : vector<8x128xf32>
    %648 = arith.index_cast %65 : i32 to index
    %c0_146 = arith.constant 0 : index
    %649 = vector.load %arg6[%648, %c0_146] : memref<8x128xf32, #tpu.memory_space<vmem>>, vector<8x128xf32>
    tpu.vector_store %arg6[%648, %c0_146], %644 {strides = array<i32>} : memref<8x128xf32, #tpu.memory_space<vmem>>, vector<8x128xf32>,
    %650 = arith.index_cast %65 : i32 to index
    %c0_147 = arith.constant 0 : index
    %651 = vector.load %arg7[%650, %c0_147] : memref<8x128xf32, #tpu.memory_space<vmem>>, vector<8x128xf32>
    tpu.vector_store %arg7[%650, %c0_147], %647 {strides = array<i32>} : memref<8x128xf32, #tpu.memory_space<vmem>>, vector<8x128xf32>,
    %c1_i32 = arith.constant 1 : i32
    return
  }
  func.func @transform_0(%arg0: i32) -> (i32, i32) {
    %c0_i32 = arith.constant 0 : i32
    %c0_i32_0 = arith.constant 0 : i32
    return %arg0, %c0_i32 : i32, i32
  }
  func.func @transform_1(%arg0: i32) -> i32 {
    %c0_i32 = arith.constant 0 : i32
    %c0_i32_0 = arith.constant 0 : i32
    return %c0_i32 : i32
  }
  func.func @transform_2(%arg0: i32) -> i32 {
    %c0_i32 = arith.constant 0 : i32
    %c0_i32_0 = arith.constant 0 : i32
    return %c0_i32 : i32
  }
  func.func @transform_3(%arg0: i32) -> i32 {
    %c0_i32 = arith.constant 0 : i32
    %c0_i32_0 = arith.constant 0 : i32
    return %c0_i32 : i32
  }
  func.func @transform_4(%arg0: i32) -> i32 {
    %c0_i32 = arith.constant 0 : i32
    %c0_i32_0 = arith.constant 0 : i32
    return %c0_i32 : i32
  }
  func.func @transform_5(%arg0: i32) -> (i32, i32) {
    %c0_i32 = arith.constant 0 : i32
    %c0_i32_0 = arith.constant 0 : i32
    return %arg0, %c0_i32 : i32, i32
  }
  func.func @transform_6(%arg0: i32) -> (i32, i32) {
    %c0_i32 = arith.constant 0 : i32
    %c0_i32_0 = arith.constant 0 : i32
    return %arg0, %c0_i32 : i32, i32
  }
}

</mosaic_0001>

<llo_original>
// kernel: tpu_custom_call.1
$region0: #{tpu_custom_call.1}
  #allocation0 [shape = 'u32[]', space=smem, size = 0x4, offset = 0x4, fixed_abs, tag = 'smem constant byte address 0x4 - core index']
  #allocation1 [shape = 'u32[144,128]{1,0:T(1,128)}', space=vmem, size = 0x12000, scoped, tag = 'internal scratch']
  %s0 = inlined_call_operand.hbm [shape: f32[8,128], index: 0, kind: input, shape index: {}]
  %s1 = inlined_call_operand.vmem [shape: f32[8], index: 1, kind: input, shape index: {}]
  %s2 = inlined_call_operand.vmem [shape: f32[8], index: 2, kind: input, shape index: {}]
  %s3 = inlined_call_operand.vmem [shape: f32[8], index: 3, kind: input, shape index: {}]
  %s4 = inlined_call_operand.vmem [shape: f32[8], index: 4, kind: input, shape index: {}]
  %s5 = inlined_call_operand.hbm [shape: f32[8,128], index: 5, kind: output, shape index: {0}]
  %s6 = inlined_call_operand.hbm [shape: f32[8,128], index: 6, kind: output, shape index: {1}]
  %7 = xla_tuple %s5, %s6
  %s8 = sld [smem:[#allocation0]]
  $region58: #{tpu_custom_call.1} parent=0
    _
  %s10 = ssub.s32 1, %s8
  %s11 = scalar_select 0, %s10, %s8
  $region1: #{tpu_custom_call.1} parent=0
    #allocation2 [shape = 'u8[4096]{0}', space=vmem, size = 0x1000, scoped, tag = 'input window, operand 0, single buffered']
    #allocation3 [shape = 's32[1]{0}', space=sflag, size = 0x4, scoped, tag = 'scoped memory for tpu_custom_call.1']
    #allocation4 [shape = 's32[1]{0}', space=sflag, size = 0x4, scoped, tag = 'scoped memory for tpu_custom_call.1']
    #allocation5 [shape = 's32[1]{0}', space=sflag, size = 0x4, scoped, tag = 'scoped memory for tpu_custom_call.1']
    #allocation6 [shape = 'u8[512]{0}', space=smem, size = 0x200, scoped, tag = 'input window, operand 1, single buffered']
    #allocation7 [shape = 'u8[512]{0}', space=smem, size = 0x200, scoped, tag = 'input window, operand 2, single buffered']
    #allocation8 [shape = 's32[1]{0}', space=sflag, size = 0x4, scoped, tag = 'scoped memory for tpu_custom_call.1']
    #allocation9 [shape = 'u8[512]{0}', space=smem, size = 0x200, scoped, tag = 'input window, operand 3, single buffered']
    #allocation10 [shape = 'u8[512]{0}', space=smem, size = 0x200, scoped, tag = 'input window, operand 4, single buffered']
    #allocation11 [shape = 's32[1]{0}', space=sflag, size = 0x4, scoped, tag = 'scoped memory for tpu_custom_call.1']
    #allocation12 [shape = 'u8[4096]{0}', space=vmem, size = 0x1000, scoped, tag = 'output window, operand 0, single buffered']
    #allocation13 [shape = 'u8[4096]{0}', space=vmem, size = 0x1000, scoped, tag = 'output window, operand 1, single buffered']
    #allocation14 [shape = 's32[1]{0}', space=sflag, size = 0x4, scoped, tag = 'scoped memory for tpu_custom_call.1']
    %12 = vsyncpa [#allocation3], 0
    %13 = vsyncpa [#allocation5], 0
    %14 = vsyncpa [#allocation8], 0
    %15 = vsyncpa [#allocation11], 0
    %16 = vsyncpa [#allocation4], 0
    %17 = vsyncpa [#allocation14], 0
    // Predicated region
    $region2: #{tpu_custom_call.1} parent=1 // pred_check
      _
    $region3: #{tpu_custom_call.1} parent=1 // pred_check_branch
      %19 = sbr.rel (0) target = $region5
    $region4: #{tpu_custom_call.1} parent=1 // pred_region
      %s21 = ssub.s32 128, 128
      %22 = vsyncadd [#allocation3], %s21
      %s24 = sshll.u32 [#allocation2], 4
      %s25 = int_to_ptr.vmem [resolvable:$true] %s24
      %27 = dma.hbm_to_vmem [thread:$0]  %s0, 128, %s25, [#allocation3]
    $region5: #{tpu_custom_call.1} parent=1 // pred_fallthru
      _
    // Predicated region
    $region6: #{tpu_custom_call.1} parent=1 // pred_check
      _
    $region7: #{tpu_custom_call.1} parent=1 // pred_check_branch
      %29 = sbr.rel (0) target = $region9
    $region8: #{tpu_custom_call.1} parent=1 // pred_region
      %s31 = ssub.s32 16, 16
      %32 = vsyncadd [#allocation5], %s31
      %s34 = sshll.u32 %s1, 4
      %s35 = int_to_ptr.vmem [resolvable:$true] %s34
      %37 = dma.vmem_to_smem %s35, 16, [#allocation6], [#allocation5]
    $region9: #{tpu_custom_call.1} parent=1 // pred_fallthru
      _
    // Predicated region
    $region10: #{tpu_custom_call.1} parent=1 // pred_check
      _
    $region11: #{tpu_custom_call.1} parent=1 // pred_check_branch
      %39 = sbr.rel (0) target = $region13
    $region12: #{tpu_custom_call.1} parent=1 // pred_region
      %s41 = ssub.s32 16, 16
      %42 = vsyncadd [#allocation8], %s41
      %s44 = sshll.u32 %s2, 4
      %s45 = int_to_ptr.vmem [resolvable:$true] %s44
      %47 = dma.vmem_to_smem %s45, 16, [#allocation7], [#allocation8]
    $region13: #{tpu_custom_call.1} parent=1 // pred_fallthru
      _
    // Predicated region
    $region14: #{tpu_custom_call.1} parent=1 // pred_check
      _
    $region15: #{tpu_custom_call.1} parent=1 // pred_check_branch
      %49 = sbr.rel (0) target = $region17
    $region16: #{tpu_custom_call.1} parent=1 // pred_region
      %s51 = ssub.s32 16, 16
      %52 = vsyncadd [#allocation8], %s51
      %s54 = sshll.u32 %s3, 4
      %s55 = int_to_ptr.vmem [resolvable:$true] %s54
      %57 = dma.vmem_to_smem %s55, 16, [#allocation9], [#allocation8]
    $region17: #{tpu_custom_call.1} parent=1 // pred_fallthru
      _
    // Predicated region
    $region18: #{tpu_custom_call.1} parent=1 // pred_check
      _
    $region19: #{tpu_custom_call.1} parent=1 // pred_check_branch
      %59 = sbr.rel (0) target = $region21
    $region20: #{tpu_custom_call.1} parent=1 // pred_region
      %s61 = ssub.s32 16, 16
      %62 = vsyncadd [#allocation11], %s61
      %s64 = sshll.u32 %s4, 4
      %s65 = int_to_ptr.vmem [resolvable:$true] %s64
      %67 = dma.vmem_to_smem %s65, 16, [#allocation10], [#allocation11]
    $region21: #{tpu_custom_call.1} parent=1 // pred_fallthru
      _
    // Predicated region
    $region22: #{tpu_custom_call.1} parent=1 // pred_check
      _
    $region23: #{tpu_custom_call.1} parent=1 // pred_check_branch
      %69 = sbr.rel (0) target = $region25
    $region24: #{tpu_custom_call.1} parent=1 // pred_region
      %70 = dma.done [#allocation3], 128
    $region25: #{tpu_custom_call.1} parent=1 // pred_fallthru
      _
    // Predicated region
    $region26: #{tpu_custom_call.1} parent=1 // pred_check
      _
    $region27: #{tpu_custom_call.1} parent=1 // pred_check_branch
      %72 = sbr.rel (0) target = $region29
    $region28: #{tpu_custom_call.1} parent=1 // pred_region
      %73 = dma.done [#allocation5], 16
    $region29: #{tpu_custom_call.1} parent=1 // pred_fallthru
      _
    // Predicated region
    $region30: #{tpu_custom_call.1} parent=1 // pred_check
      _
    $region31: #{tpu_custom_call.1} parent=1 // pred_check_branch
      %75 = sbr.rel (0) target = $region33
    $region32: #{tpu_custom_call.1} parent=1 // pred_region
      %76 = dma.done [#allocation8], 16
    $region33: #{tpu_custom_call.1} parent=1 // pred_fallthru
      _
    // Predicated region
    $region34: #{tpu_custom_call.1} parent=1 // pred_check
      _
    $region35: #{tpu_custom_call.1} parent=1 // pred_check_branch
      %78 = sbr.rel (0) target = $region37
    $region36: #{tpu_custom_call.1} parent=1 // pred_region
      %79 = dma.done [#allocation8], 16
    $region37: #{tpu_custom_call.1} parent=1 // pred_fallthru
      _
    // Predicated region
    $region38: #{tpu_custom_call.1} parent=1 // pred_check
      _
    $region39: #{tpu_custom_call.1} parent=1 // pred_check_branch
      %81 = sbr.rel (0) target = $region41
    $region40: #{tpu_custom_call.1} parent=1 // pred_region
      %82 = dma.done [#allocation11], 16
    $region41: #{tpu_custom_call.1} parent=1 // pred_fallthru
      _
    %83 = sfence
    %s84 = sld [smem:[#allocation6]]
    %s85 = sld [smem:[#allocation6 + $0x1]]
    %s86 = sld [smem:[#allocation6 + $0x2]]
    %s87 = sld [smem:[#allocation6 + $0x3]]
    %s88 = sld [smem:[#allocation6 + $0x4]]
    %s89 = sld [smem:[#allocation6 + $0x5]]
    %s90 = sld [smem:[#allocation6 + $0x6]]
    %s91 = sld [smem:[#allocation6 + $0x7]]
    %s92 = sld [smem:[#allocation7]]
    %s93 = sld [smem:[#allocation7 + $0x1]]
    %s94 = sld [smem:[#allocation7 + $0x2]]
    %s95 = sld [smem:[#allocation7 + $0x3]]
    %s96 = sld [smem:[#allocation7 + $0x4]]
    %s97 = sld [smem:[#allocation7 + $0x5]]
    %s98 = sld [smem:[#allocation7 + $0x6]]
    %s99 = sld [smem:[#allocation7 + $0x7]]
    %s100 = sld [smem:[#allocation9]]
    %s101 = sld [smem:[#allocation9 + $0x1]]
    %s102 = sld [smem:[#allocation9 + $0x2]]
    %s103 = sld [smem:[#allocation9 + $0x3]]
    %s104 = sld [smem:[#allocation9 + $0x4]]
    %s105 = sld [smem:[#allocation9 + $0x5]]
    %s106 = sld [smem:[#allocation9 + $0x6]]
    %s107 = sld [smem:[#allocation9 + $0x7]]
    %s108 = sld [smem:[#allocation10]]
    %s109 = sld [smem:[#allocation10 + $0x1]]
    %s110 = sld [smem:[#allocation10 + $0x2]]
    %s111 = sld [smem:[#allocation10 + $0x3]]
    %s112 = sld [smem:[#allocation10 + $0x4]]
    %s113 = sld [smem:[#allocation10 + $0x5]]
    %s114 = sld [smem:[#allocation10 + $0x6]]
    %s115 = sld [smem:[#allocation10 + $0x7]]
    %s116 = smul.f32 %s92, %s92
    %s117 = smul.f32 %s100, %s100
    %s118 = sadd.f32 %s116, %s117
    %s119 = ssub.f32 1.0, %s118
    %s120 = smul.f32 %s93, %s93
    %s121 = smul.f32 %s101, %s101
    %s122 = sadd.f32 %s120, %s121
    %s123 = ssub.f32 1.0, %s122
    %s124 = smul.f32 %s94, %s94
    %s125 = smul.f32 %s102, %s102
    %s126 = sadd.f32 %s124, %s125
    %s127 = ssub.f32 1.0, %s126
    %s128 = smul.f32 %s95, %s95
    %s129 = smul.f32 %s103, %s103
    %s130 = sadd.f32 %s128, %s129
    %s131 = ssub.f32 1.0, %s130
    %s132 = smul.f32 %s96, %s96
    %s133 = smul.f32 %s104, %s104
    %s134 = sadd.f32 %s132, %s133
    %s135 = ssub.f32 1.0, %s134
    %s136 = smul.f32 %s97, %s97
    %s137 = smul.f32 %s105, %s105
    %s138 = sadd.f32 %s136, %s137
    %s139 = ssub.f32 1.0, %s138
    %s140 = smul.f32 %s98, %s98
    %s141 = smul.f32 %s106, %s106
    %s142 = sadd.f32 %s140, %s141
    %s143 = ssub.f32 1.0, %s142
    %s144 = smul.f32 %s99, %s99
    %s145 = smul.f32 %s107, %s107
    %s146 = sadd.f32 %s144, %s145
    %s147 = ssub.f32 1.0, %s146
    %v148 = vld [vmem:[#allocation2] sm:$0xff]
    %v149 = vand.u32 2147483647, %v148
    %vm150 = vcmp.le.f32.partialorder %v149, 0.7853982
    %vm151 = vcmp.lt.s32.totalorder %v148, 0
    %v152 = vand.u32 %v148, 2139095040
    %v153 = vshrl.u32 %v152, 23
    %v154 = vsub.s32 %v153, 127
    %v155 = vand.u32 2147483647, %v148
    %v156 = vand.u32 %v155, 8388607
    %v157 = vor.u32 %v156, 8388608
    %v158 = vsub.s32 0, %v157
    %v159 = vadd.s32 %v154, 1
    %vm160 = vcmp.gt.s32.totalorder %v159, 0
    %v161 = vsel %vm160, %v159, 0
    %v162 = vshrl.u32 %v161, 5
    %v163 = vand.u32 %v161, 31
    %v164 = vsub.s32 32, %v163
    %v165 = vshrl.u32 683565275, %v164
    %v166 = vshll.u32 683565275, %v163
    %v167 = vshrl.u32 2475754826, %v164
    %v168 = vor.u32 %v166, %v167
    %v169 = vshll.u32 2475754826, %v163
    %v170 = vshrl.u32 2131351028, %v164
    %v171 = vor.u32 %v169, %v170
    %v172 = vshll.u32 2131351028, %v163
    %v173 = vshrl.u32 2102212464, %v164
    %v174 = vor.u32 %v172, %v173
    %v175 = vshll.u32 2102212464, %v163
    %v176 = vshrl.u32 920167782, %v164
    %v177 = vor.u32 %v175, %v176
    %v178 = vshll.u32 920167782, %v163
    %v179 = vshrl.u32 1326507024, %v164
    %v180 = vor.u32 %v178, %v179
    %vm181 = vcmp.lt.s32.totalorder %v162, 1
    %vm182 = vcmp.lt.s32.totalorder %v162, 2
    %vm183 = vcmp.lt.s32.totalorder %v162, 3
    %vm184 = vcmp.lt.s32.totalorder %v162, 4
    %v185 = vsel %vm181, %v165, %v168
    %v186 = vsel %vm184, %v174, 2102212464
    %v187 = vsel %vm183, %v171, %v186
    %v188 = vsel %vm182, %v185, %v187
    %v189 = vsel %vm181, %v168, %v171
    %v190 = vsel %vm184, %v177, 920167782
    %v191 = vsel %vm183, %v174, %v190
    %v192 = vsel %vm182, %v189, %v191
    %v193 = vsel %vm181, %v171, %v174
    %v194 = vsel %vm184, %v180, 1326507024
    %v195 = vsel %vm183, %v177, %v194
    %v196 = vsel %vm182, %v193, %v195
    %v197 = vshll.u32 %v157, 8
    %v198 = vmul.u32.u64.compose %v197, %v196
    %v199 = vextract.low.u32 %v198
    %v200 = vextract.high.u32 %v198
    %v201 = vmul.u32.u64.compose %v197, %v192
    %v202 = vextract.low.u32 %v201
    %v203 = vextract.high.u32 %v201
    %v204 = vmul.u32 %v197, %v188
    %v205 = vadd.s32 %v200, %v202
    %vm206 = vc.u32 %v200, %v202
    %v207 = vadd.s32 %v203, 1
    %v208 = vsel %vm206, %v207, %v203
    %v209 = vadd.s32 %v204, %v208
    %v210 = vadd.s32 %v209, 536870912
    %v211 = vshrl.u32 %v210, 30
    %v212 = vshll.u32 %v211, 30
    %v213 = vsub.s32 %v209, %v212
    %vm214 = vcmp.lt.s32.totalorder %v213, 0
    %v215 = vsub.s32 0, %v213
    %v216 = vsel %vm214, %v215, %v213
    %v217 = vclz %v216
    %v218 = vsub.s32 %v217, 2
    %vm219 = vcmp.gt.s32.totalorder 0, %v218
    %v220 = vsel %vm219, 0, %v218
    %v221 = vsub.s32 32, %v220
    %v222 = vshll.u32 %v213, %v220
    %v223 = vshrl.u32 %v205, %v221
    %v224 = vor.u32 %v222, %v223
    %v225 = vsub.s32 4294967266, %v220
    %v226 = vadd.s32 %v225, 127
    %v227 = vshll.u32 %v226, 23
    %v228 = vor.u32 4788187, %v227
    %v229 = vand.u32 2147483647, %v228
    %v231 = vcvt.s32.f32 %v224
    %v232 = vmul.f32 %v231, %v229
    %v233 = vxor.u32 %v232, 2147483648
    %v234 = vsel %vm151, %v233, %v232
    %v235 = vsub.s32 4, %v211
    %v236 = vsel %vm151, %v235, %v211
    %v237 = vsel %vm150, %v148, %v234
    %v238 = vsel %vm150, 0, %v236
    %v239 = vcosq.f32.pop %v237
    %v240 = vsinq.f32.pop %v237
    %vm241 = vweird.f32 %v148
    %v242 = vand.u32 %v238, 3
    %vm243 = vcmp.lt.s32.totalorder %v242, 2
    %vm244 = vcmp.eq.s32.totalorder %v242, 0
    %v245 = vxor.u32 %v240, 2147483648
    %v246 = vsel %vm244, %v239, %v245
    %vm247 = vcmp.eq.s32.totalorder %v242, 2
    %v248 = vxor.u32 %v239, 2147483648
    %v249 = vsel %vm247, %v248, %v240
    %v250 = vsel %vm243, %v246, %v249
    %v251 = vsel %vm241, nan, %v250
    %v252 = vand.u32 2147483647, %v148
    %vm253 = vcmp.le.f32.partialorder %v252, 0.7853982
    %vm254 = vcmp.lt.s32.totalorder %v148, 0
    %v255 = vand.u32 %v148, 2139095040
    %v256 = vshrl.u32 %v255, 23
    %v257 = vsub.s32 %v256, 127
    %v258 = vand.u32 2147483647, %v148
    %v259 = vand.u32 %v258, 8388607
    %v260 = vor.u32 %v259, 8388608
    %v261 = vsub.s32 0, %v260
    %v262 = vadd.s32 %v257, 1
    %vm263 = vcmp.gt.s32.totalorder %v262, 0
    %v264 = vsel %vm263, %v262, 0
    %v265 = vshrl.u32 %v264, 5
    %v266 = vand.u32 %v264, 31
    %v267 = vsub.s32 32, %v266
    %v268 = vshrl.u32 683565275, %v267
    %v269 = vshll.u32 683565275, %v266
    %v270 = vshrl.u32 2475754826, %v267
    %v271 = vor.u32 %v269, %v270
    %v272 = vshll.u32 2475754826, %v266
    %v273 = vshrl.u32 2131351028, %v267
    %v274 = vor.u32 %v272, %v273
    %v275 = vshll.u32 2131351028, %v266
    %v276 = vshrl.u32 2102212464, %v267
    %v277 = vor.u32 %v275, %v276
    %v278 = vshll.u32 2102212464, %v266
    %v279 = vshrl.u32 920167782, %v267
    %v280 = vor.u32 %v278, %v279
    %v281 = vshll.u32 920167782, %v266
    %v282 = vshrl.u32 1326507024, %v267
    %v283 = vor.u32 %v281, %v282
    %vm284 = vcmp.lt.s32.totalorder %v265, 1
    %vm285 = vcmp.lt.s32.totalorder %v265, 2
    %vm286 = vcmp.lt.s32.totalorder %v265, 3
    %vm287 = vcmp.lt.s32.totalorder %v265, 4
    %v288 = vsel %vm284, %v268, %v271
    %v289 = vsel %vm287, %v277, 2102212464
    %v290 = vsel %vm286, %v274, %v289
    %v291 = vsel %vm285, %v288, %v290
    %v292 = vsel %vm284, %v271, %v274
    %v293 = vsel %vm287, %v280, 920167782
    %v294 = vsel %vm286, %v277, %v293
    %v295 = vsel %vm285, %v292, %v294
    %v296 = vsel %vm284, %v274, %v277
    %v297 = vsel %vm287, %v283, 1326507024
    %v298 = vsel %vm286, %v280, %v297
    %v299 = vsel %vm285, %v296, %v298
    %v300 = vshll.u32 %v260, 8
    %v301 = vmul.u32.u64.compose %v300, %v299
    %v302 = vextract.low.u32 %v301
    %v303 = vextract.high.u32 %v301
    %v304 = vmul.u32.u64.compose %v300, %v295
    %v305 = vextract.low.u32 %v304
    %v306 = vextract.high.u32 %v304
    %v307 = vmul.u32 %v300, %v291
    %v308 = vadd.s32 %v303, %v305
    %vm309 = vc.u32 %v303, %v305
    %v310 = vadd.s32 %v306, 1
    %v311 = vsel %vm309, %v310, %v306
    %v312 = vadd.s32 %v307, %v311
    %v313 = vadd.s32 %v312, 536870912
    %v314 = vshrl.u32 %v313, 30
    %v315 = vshll.u32 %v314, 30
    %v316 = vsub.s32 %v312, %v315
    %vm317 = vcmp.lt.s32.totalorder %v316, 0
    %v318 = vsub.s32 0, %v316
    %v319 = vsel %vm317, %v318, %v316
    %v320 = vclz %v319
    %v321 = vsub.s32 %v320, 2
    %vm322 = vcmp.gt.s32.totalorder 0, %v321
    %v323 = vsel %vm322, 0, %v321
    %v324 = vsub.s32 32, %v323
    %v325 = vshll.u32 %v316, %v323
    %v326 = vshrl.u32 %v308, %v324
    %v327 = vor.u32 %v325, %v326
    %v328 = vsub.s32 4294967266, %v323
    %v329 = vadd.s32 %v328, 127
    %v330 = vshll.u32 %v329, 23
    %v331 = vor.u32 4788187, %v330
    %v332 = vand.u32 2147483647, %v331
    %v334 = vcvt.s32.f32 %v327
    %v335 = vmul.f32 %v334, %v332
    %v336 = vxor.u32 %v335, 2147483648
    %v337 = vsel %vm254, %v336, %v335
    %v338 = vsub.s32 4, %v314
    %v339 = vsel %vm254, %v338, %v314
    %v340 = vsel %vm253, %v148, %v337
    %v341 = vsel %vm253, 0, %v339
    %v342 = vcosq.f32.pop %v340
    %v343 = vsinq.f32.pop %v340
    %vm344 = vweird.f32 %v148
    %v345 = vadd.s32 %v341, 3
    %v346 = vand.u32 %v345, 3
    %vm347 = vcmp.lt.s32.totalorder %v346, 2
    %vm348 = vcmp.eq.s32.totalorder %v346, 0
    %v349 = vxor.u32 %v343, 2147483648
    %v350 = vsel %vm348, %v342, %v349
    %vm351 = vcmp.eq.s32.totalorder %v346, 2
    %v352 = vxor.u32 %v342, 2147483648
    %v353 = vsel %vm351, %v352, %v343
    %v354 = vsel %vm347, %v350, %v353
    %v355 = vsel %vm344, nan, %v354
    %v356 = vstv %s92
    %v357 = vsub.f32 %v251, %v356
    %v358 = vstv %s100
    %v359 = vsub.f32 %v355, %v358
    %v360 = vmul.f32 %v357, %v357
    %v361 = vmul.f32 %v359, %v359
    %v362 = vadd.f32 %v360, %v361
    %v363 = vrcp.pop %v362
    %v364 = vmul.f32 %v362, %v363
    %v365 = vsub.f32 2.0, %v364
    %v366 = vmul.f32 %v363, %v365
    %v367 = vstv %s119
    %v368 = vmul.f32 %v367, %v366
    %v369 = vmul.f32 %v368, %v357
    %v370 = vsub.f32 %v369, %v356
    %v371 = vmul.f32 %v368, %v359
    %v372 = vsub.f32 %v371, %v358
    %v373 = vand.u32 2147483647, %v372
    %v374 = vand.u32 2147483647, %v370
    %v375 = vmin.f32 %v373, %v374
    %v376 = vmax.f32 %v373, %v374
    %v377 = vrcp.pop %v376
    %v378 = vmul.f32 %v376, %v377
    %v379 = vsub.f32 2.0, %v378
    %v380 = vmul.f32 %v377, %v379
    %v381 = vmul.f32 %v375, %v380
    %v382 = vmul.f32 %v381, %v381
    %v383 = vmul.f32 %v382, 0.0208351
    %v384 = vadd.f32 %v383, -0.085133
    %v385 = vmul.f32 %v384, %v382
    %v386 = vadd.f32 %v385, 0.180141
    %v387 = vmul.f32 %v386, %v382
    %v388 = vadd.f32 %v387, -0.3302995
    %v389 = vmul.f32 %v388, %v382
    %v390 = vadd.f32 %v389, 0.999866
    %v391 = vmul.f32 %v390, %v381
    %vm392 = vcmp.gt.f32.partialorder %v373, %v374
    %v393 = vsub.f32 1.5707964, %v391
    %v394 = vsel %vm392, %v393, %v391
    %vm395 = vcmp.ge.f32.partialorder %v370, 0.0
    %v396 = vsub.f32 3.1415927, %v394
    %v397 = vsel %vm395, %v394, %v396
    %vm398 = vcmp.ge.f32.partialorder %v372, 0.0
    %v399 = vsub.f32 0.0, %v397
    %v400 = vsel %vm398, %v397, %v399
    %v401 = vstv %s108
    %v402 = vsub.f32 %v400, %v401
    %vm403 = vcmp.ge.f32.partialorder %v402, 0.0
    %v404 = vadd.f32 %v402, 6.2831855
    %v405 = vsel %vm403, %v402, %v404
    %v406 = vstv %s84
    %v407 = vmul.f32 %v406, %v405
    %v408 = vadd.f32 %v407, 0.0
    %v409 = vmul.f32 %v406, %v368
    %v410 = vadd.f32 %v409, 0.0
    %v411 = vstv %s93
    %v412 = vsub.f32 %v251, %v411
    %v413 = vstv %s101
    %v414 = vsub.f32 %v355, %v413
    %v415 = vmul.f32 %v412, %v412
    %v416 = vmul.f32 %v414, %v414
    %v417 = vadd.f32 %v415, %v416
    %v418 = vrcp.pop %v417
    %v419 = vmul.f32 %v417, %v418
    %v420 = vsub.f32 2.0, %v419
    %v421 = vmul.f32 %v418, %v420
    %v422 = vstv %s123
    %v423 = vmul.f32 %v422, %v421
    %v424 = vmul.f32 %v423, %v412
    %v425 = vsub.f32 %v424, %v411
    %v426 = vmul.f32 %v423, %v414
    %v427 = vsub.f32 %v426, %v413
    %v428 = vand.u32 2147483647, %v427
    %v429 = vand.u32 2147483647, %v425
    %v430 = vmin.f32 %v428, %v429
    %v431 = vmax.f32 %v428, %v429
    %v432 = vrcp.pop %v431
    %v433 = vmul.f32 %v431, %v432
    %v434 = vsub.f32 2.0, %v433
    %v435 = vmul.f32 %v432, %v434
    %v436 = vmul.f32 %v430, %v435
    %v437 = vmul.f32 %v436, %v436
    %v438 = vmul.f32 %v437, 0.0208351
    %v439 = vadd.f32 %v438, -0.085133
    %v440 = vmul.f32 %v439, %v437
    %v441 = vadd.f32 %v440, 0.180141
    %v442 = vmul.f32 %v441, %v437
    %v443 = vadd.f32 %v442, -0.3302995
    %v444 = vmul.f32 %v443, %v437
    %v445 = vadd.f32 %v444, 0.999866
    %v446 = vmul.f32 %v445, %v436
    %vm447 = vcmp.gt.f32.partialorder %v428, %v429
    %v448 = vsub.f32 1.5707964, %v446
    %v449 = vsel %vm447, %v448, %v446
    %vm450 = vcmp.ge.f32.partialorder %v425, 0.0
    %v451 = vsub.f32 3.1415927, %v449
    %v452 = vsel %vm450, %v449, %v451
    %vm453 = vcmp.ge.f32.partialorder %v427, 0.0
    %v454 = vsub.f32 0.0, %v452
    %v455 = vsel %vm453, %v452, %v454
    %v456 = vstv %s109
    %v457 = vsub.f32 %v455, %v456
    %vm458 = vcmp.ge.f32.partialorder %v457, 0.0
    %v459 = vadd.f32 %v457, 6.2831855
    %v460 = vsel %vm458, %v457, %v459
    %v461 = vstv %s85
    %v462 = vmul.f32 %v461, %v460
    %v463 = vadd.f32 %v408, %v462
    %v464 = vmul.f32 %v461, %v423
    %v465 = vadd.f32 %v410, %v464
    %v466 = vstv %s94
    %v467 = vsub.f32 %v251, %v466
    %v468 = vstv %s102
    %v469 = vsub.f32 %v355, %v468
    %v470 = vmul.f32 %v467, %v467
    %v471 = vmul.f32 %v469, %v469
    %v472 = vadd.f32 %v470, %v471
    %v473 = vrcp.pop %v472
    %v474 = vmul.f32 %v472, %v473
    %v475 = vsub.f32 2.0, %v474
    %v476 = vmul.f32 %v473, %v475
    %v477 = vstv %s127
    %v478 = vmul.f32 %v477, %v476
    %v479 = vmul.f32 %v478, %v467
    %v480 = vsub.f32 %v479, %v466
    %v481 = vmul.f32 %v478, %v469
    %v482 = vsub.f32 %v481, %v468
    %v483 = vand.u32 2147483647, %v482
    %v484 = vand.u32 2147483647, %v480
    %v485 = vmin.f32 %v483, %v484
    %v486 = vmax.f32 %v483, %v484
    %v487 = vrcp.pop %v486
    %v488 = vmul.f32 %v486, %v487
    %v489 = vsub.f32 2.0, %v488
    %v490 = vmul.f32 %v487, %v489
    %v491 = vmul.f32 %v485, %v490
    %v492 = vmul.f32 %v491, %v491
    %v493 = vmul.f32 %v492, 0.0208351
    %v494 = vadd.f32 %v493, -0.085133
    %v495 = vmul.f32 %v494, %v492
    %v496 = vadd.f32 %v495, 0.180141
    %v497 = vmul.f32 %v496, %v492
    %v498 = vadd.f32 %v497, -0.3302995
    %v499 = vmul.f32 %v498, %v492
    %v500 = vadd.f32 %v499, 0.999866
    %v501 = vmul.f32 %v500, %v491
    %vm502 = vcmp.gt.f32.partialorder %v483, %v484
    %v503 = vsub.f32 1.5707964, %v501
    %v504 = vsel %vm502, %v503, %v501
    %vm505 = vcmp.ge.f32.partialorder %v480, 0.0
    %v506 = vsub.f32 3.1415927, %v504
    %v507 = vsel %vm505, %v504, %v506
    %vm508 = vcmp.ge.f32.partialorder %v482, 0.0
    %v509 = vsub.f32 0.0, %v507
    %v510 = vsel %vm508, %v507, %v509
    %v511 = vstv %s110
    %v512 = vsub.f32 %v510, %v511
    %vm513 = vcmp.ge.f32.partialorder %v512, 0.0
    %v514 = vadd.f32 %v512, 6.2831855
    %v515 = vsel %vm513, %v512, %v514
    %v516 = vstv %s86
    %v517 = vmul.f32 %v516, %v515
    %v518 = vadd.f32 %v463, %v517
    %v519 = vmul.f32 %v516, %v478
    %v520 = vadd.f32 %v465, %v519
    %v521 = vstv %s95
    %v522 = vsub.f32 %v251, %v521
    %v523 = vstv %s103
    %v524 = vsub.f32 %v355, %v523
    %v525 = vmul.f32 %v522, %v522
    %v526 = vmul.f32 %v524, %v524
    %v527 = vadd.f32 %v525, %v526
    %v528 = vrcp.pop %v527
    %v529 = vmul.f32 %v527, %v528
    %v530 = vsub.f32 2.0, %v529
    %v531 = vmul.f32 %v528, %v530
    %v532 = vstv %s131
    %v533 = vmul.f32 %v532, %v531
    %v534 = vmul.f32 %v533, %v522
    %v535 = vsub.f32 %v534, %v521
    %v536 = vmul.f32 %v533, %v524
    %v537 = vsub.f32 %v536, %v523
    %v538 = vand.u32 2147483647, %v537
    %v539 = vand.u32 2147483647, %v535
    %v540 = vmin.f32 %v538, %v539
    %v541 = vmax.f32 %v538, %v539
    %v542 = vrcp.pop %v541
    %v543 = vmul.f32 %v541, %v542
    %v544 = vsub.f32 2.0, %v543
    %v545 = vmul.f32 %v542, %v544
    %v546 = vmul.f32 %v540, %v545
    %v547 = vmul.f32 %v546, %v546
    %v548 = vmul.f32 %v547, 0.0208351
    %v549 = vadd.f32 %v548, -0.085133
    %v550 = vmul.f32 %v549, %v547
    %v551 = vadd.f32 %v550, 0.180141
    %v552 = vmul.f32 %v551, %v547
    %v553 = vadd.f32 %v552, -0.3302995
    %v554 = vmul.f32 %v553, %v547
    %v555 = vadd.f32 %v554, 0.999866
    %v556 = vmul.f32 %v555, %v546
    %vm557 = vcmp.gt.f32.partialorder %v538, %v539
    %v558 = vsub.f32 1.5707964, %v556
    %v559 = vsel %vm557, %v558, %v556
    %vm560 = vcmp.ge.f32.partialorder %v535, 0.0
    %v561 = vsub.f32 3.1415927, %v559
    %v562 = vsel %vm560, %v559, %v561
    %vm563 = vcmp.ge.f32.partialorder %v537, 0.0
    %v564 = vsub.f32 0.0, %v562
    %v565 = vsel %vm563, %v562, %v564
    %v566 = vstv %s111
    %v567 = vsub.f32 %v565, %v566
    %vm568 = vcmp.ge.f32.partialorder %v567, 0.0
    %v569 = vadd.f32 %v567, 6.2831855
    %v570 = vsel %vm568, %v567, %v569
    %v571 = vstv %s87
    %v572 = vmul.f32 %v571, %v570
    %v573 = vadd.f32 %v518, %v572
    %v574 = vmul.f32 %v571, %v533
    %v575 = vadd.f32 %v520, %v574
    %v576 = vstv %s96
    %v577 = vsub.f32 %v251, %v576
    %v578 = vstv %s104
    %v579 = vsub.f32 %v355, %v578
    %v580 = vmul.f32 %v577, %v577
    %v581 = vmul.f32 %v579, %v579
    %v582 = vadd.f32 %v580, %v581
    %v583 = vrcp.pop %v582
    %v584 = vmul.f32 %v582, %v583
    %v585 = vsub.f32 2.0, %v584
    %v586 = vmul.f32 %v583, %v585
    %v587 = vstv %s135
    %v588 = vmul.f32 %v587, %v586
    %v589 = vmul.f32 %v588, %v577
    %v590 = vsub.f32 %v589, %v576
    %v591 = vmul.f32 %v588, %v579
    %v592 = vsub.f32 %v591, %v578
    %v593 = vand.u32 2147483647, %v592
    %v594 = vand.u32 2147483647, %v590
    %v595 = vmin.f32 %v593, %v594
    %v596 = vmax.f32 %v593, %v594
    %v597 = vrcp.pop %v596
    %v598 = vmul.f32 %v596, %v597
    %v599 = vsub.f32 2.0, %v598
    %v600 = vmul.f32 %v597, %v599
    %v601 = vmul.f32 %v595, %v600
    %v602 = vmul.f32 %v601, %v601
    %v603 = vmul.f32 %v602, 0.0208351
    %v604 = vadd.f32 %v603, -0.085133
    %v605 = vmul.f32 %v604, %v602
    %v606 = vadd.f32 %v605, 0.180141
    %v607 = vmul.f32 %v606, %v602
    %v608 = vadd.f32 %v607, -0.3302995
    %v609 = vmul.f32 %v608, %v602
    %v610 = vadd.f32 %v609, 0.999866
    %v611 = vmul.f32 %v610, %v601
    %vm612 = vcmp.gt.f32.partialorder %v593, %v594
    %v613 = vsub.f32 1.5707964, %v611
    %v614 = vsel %vm612, %v613, %v611
    %vm615 = vcmp.ge.f32.partialorder %v590, 0.0
    %v616 = vsub.f32 3.1415927, %v614
    %v617 = vsel %vm615, %v614, %v616
    %vm618 = vcmp.ge.f32.partialorder %v592, 0.0
    %v619 = vsub.f32 0.0, %v617
    %v620 = vsel %vm618, %v617, %v619
    %v621 = vstv %s112
    %v622 = vsub.f32 %v620, %v621
    %vm623 = vcmp.ge.f32.partialorder %v622, 0.0
    %v624 = vadd.f32 %v622, 6.2831855
    %v625 = vsel %vm623, %v622, %v624
    %v626 = vstv %s88
    %v627 = vmul.f32 %v626, %v625
    %v628 = vadd.f32 %v573, %v627
    %v629 = vmul.f32 %v626, %v588
    %v630 = vadd.f32 %v575, %v629
    %v631 = vstv %s97
    %v632 = vsub.f32 %v251, %v631
    %v633 = vstv %s105
    %v634 = vsub.f32 %v355, %v633
    %v635 = vmul.f32 %v632, %v632
    %v636 = vmul.f32 %v634, %v634
    %v637 = vadd.f32 %v635, %v636
    %v638 = vrcp.pop %v637
    %v639 = vmul.f32 %v637, %v638
    %v640 = vsub.f32 2.0, %v639
    %v641 = vmul.f32 %v638, %v640
    %v642 = vstv %s139
    %v643 = vmul.f32 %v642, %v641
    %v644 = vmul.f32 %v643, %v632
    %v645 = vsub.f32 %v644, %v631
    %v646 = vmul.f32 %v643, %v634
    %v647 = vsub.f32 %v646, %v633
    %v648 = vand.u32 2147483647, %v647
    %v649 = vand.u32 2147483647, %v645
    %v650 = vmin.f32 %v648, %v649
    %v651 = vmax.f32 %v648, %v649
    %v652 = vrcp.pop %v651
    %v653 = vmul.f32 %v651, %v652
    %v654 = vsub.f32 2.0, %v653
    %v655 = vmul.f32 %v652, %v654
    %v656 = vmul.f32 %v650, %v655
    %v657 = vmul.f32 %v656, %v656
    %v658 = vmul.f32 %v657, 0.0208351
    %v659 = vadd.f32 %v658, -0.085133
    %v660 = vmul.f32 %v659, %v657
    %v661 = vadd.f32 %v660, 0.180141
    %v662 = vmul.f32 %v661, %v657
    %v663 = vadd.f32 %v662, -0.3302995
    %v664 = vmul.f32 %v663, %v657
    %v665 = vadd.f32 %v664, 0.999866
    %v666 = vmul.f32 %v665, %v656
    %vm667 = vcmp.gt.f32.partialorder %v648, %v649
    %v668 = vsub.f32 1.5707964, %v666
    %v669 = vsel %vm667, %v668, %v666
    %vm670 = vcmp.ge.f32.partialorder %v645, 0.0
    %v671 = vsub.f32 3.1415927, %v669
    %v672 = vsel %vm670, %v669, %v671
    %vm673 = vcmp.ge.f32.partialorder %v647, 0.0
    %v674 = vsub.f32 0.0, %v672
    %v675 = vsel %vm673, %v672, %v674
    %v676 = vstv %s113
    %v677 = vsub.f32 %v675, %v676
    %vm678 = vcmp.ge.f32.partialorder %v677, 0.0
    %v679 = vadd.f32 %v677, 6.2831855
    %v680 = vsel %vm678, %v677, %v679
    %v681 = vstv %s89
    %v682 = vmul.f32 %v681, %v680
    %v683 = vadd.f32 %v628, %v682
    %v684 = vmul.f32 %v681, %v643
    %v685 = vadd.f32 %v630, %v684
    %v686 = vstv %s98
    %v687 = vsub.f32 %v251, %v686
    %v688 = vstv %s106
    %v689 = vsub.f32 %v355, %v688
    %v690 = vmul.f32 %v687, %v687
    %v691 = vmul.f32 %v689, %v689
    %v692 = vadd.f32 %v690, %v691
    %v693 = vrcp.pop %v692
    %v694 = vmul.f32 %v692, %v693
    %v695 = vsub.f32 2.0, %v694
    %v696 = vmul.f32 %v693, %v695
    %v697 = vstv %s143
    %v698 = vmul.f32 %v697, %v696
    %v699 = vmul.f32 %v698, %v687
    %v700 = vsub.f32 %v699, %v686
    %v701 = vmul.f32 %v698, %v689
    %v702 = vsub.f32 %v701, %v688
    %v703 = vand.u32 2147483647, %v702
    %v704 = vand.u32 2147483647, %v700
    %v705 = vmin.f32 %v703, %v704
    %v706 = vmax.f32 %v703, %v704
    %v707 = vrcp.pop %v706
    %v708 = vmul.f32 %v706, %v707
    %v709 = vsub.f32 2.0, %v708
    %v710 = vmul.f32 %v707, %v709
    %v711 = vmul.f32 %v705, %v710
    %v712 = vmul.f32 %v711, %v711
    %v713 = vmul.f32 %v712, 0.0208351
    %v714 = vadd.f32 %v713, -0.085133
    %v715 = vmul.f32 %v714, %v712
    %v716 = vadd.f32 %v715, 0.180141
    %v717 = vmul.f32 %v716, %v712
    %v718 = vadd.f32 %v717, -0.3302995
    %v719 = vmul.f32 %v718, %v712
    %v720 = vadd.f32 %v719, 0.999866
    %v721 = vmul.f32 %v720, %v711
    %vm722 = vcmp.gt.f32.partialorder %v703, %v704
    %v723 = vsub.f32 1.5707964, %v721
    %v724 = vsel %vm722, %v723, %v721
    %vm725 = vcmp.ge.f32.partialorder %v700, 0.0
    %v726 = vsub.f32 3.1415927, %v724
    %v727 = vsel %vm725, %v724, %v726
    %vm728 = vcmp.ge.f32.partialorder %v702, 0.0
    %v729 = vsub.f32 0.0, %v727
    %v730 = vsel %vm728, %v727, %v729
    %v731 = vstv %s114
    %v732 = vsub.f32 %v730, %v731
    %vm733 = vcmp.ge.f32.partialorder %v732, 0.0
    %v734 = vadd.f32 %v732, 6.2831855
    %v735 = vsel %vm733, %v732, %v734
    %v736 = vstv %s90
    %v737 = vmul.f32 %v736, %v735
    %v738 = vadd.f32 %v683, %v737
    %v739 = vmul.f32 %v736, %v698
    %v740 = vadd.f32 %v685, %v739
    %v741 = vstv %s99
    %v742 = vsub.f32 %v251, %v741
    %v743 = vstv %s107
    %v744 = vsub.f32 %v355, %v743
    %v745 = vmul.f32 %v742, %v742
    %v746 = vmul.f32 %v744, %v744
    %v747 = vadd.f32 %v745, %v746
    %v748 = vrcp.pop %v747
    %v749 = vmul.f32 %v747, %v748
    %v750 = vsub.f32 2.0, %v749
    %v751 = vmul.f32 %v748, %v750
    %v752 = vstv %s147
    %v753 = vmul.f32 %v752, %v751
    %v754 = vmul.f32 %v753, %v742
    %v755 = vsub.f32 %v754, %v741
    %v756 = vmul.f32 %v753, %v744
    %v757 = vsub.f32 %v756, %v743
    %v758 = vand.u32 2147483647, %v757
    %v759 = vand.u32 2147483647, %v755
    %v760 = vmin.f32 %v758, %v759
    %v761 = vmax.f32 %v758, %v759
    %v762 = vrcp.pop %v761
    %v763 = vmul.f32 %v761, %v762
    %v764 = vsub.f32 2.0, %v763
    %v765 = vmul.f32 %v762, %v764
    %v766 = vmul.f32 %v760, %v765
    %v767 = vmul.f32 %v766, %v766
    %v768 = vmul.f32 %v767, 0.0208351
    %v769 = vadd.f32 %v768, -0.085133
    %v770 = vmul.f32 %v769, %v767
    %v771 = vadd.f32 %v770, 0.180141
    %v772 = vmul.f32 %v771, %v767
    %v773 = vadd.f32 %v772, -0.3302995
    %v774 = vmul.f32 %v773, %v767
    %v775 = vadd.f32 %v774, 0.999866
    %v776 = vmul.f32 %v775, %v766
    %vm777 = vcmp.gt.f32.partialorder %v758, %v759
    %v778 = vsub.f32 1.5707964, %v776
    %v779 = vsel %vm777, %v778, %v776
    %vm780 = vcmp.ge.f32.partialorder %v755, 0.0
    %v781 = vsub.f32 3.1415927, %v779
    %v782 = vsel %vm780, %v779, %v781
    %vm783 = vcmp.ge.f32.partialorder %v757, 0.0
    %v784 = vsub.f32 0.0, %v782
    %v785 = vsel %vm783, %v782, %v784
    %v786 = vstv %s115
    %v787 = vsub.f32 %v785, %v786
    %vm788 = vcmp.ge.f32.partialorder %v787, 0.0
    %v789 = vadd.f32 %v787, 6.2831855
    %v790 = vsel %vm788, %v787, %v789
    %v791 = vstv %s91
    %v792 = vmul.f32 %v791, %v790
    %v793 = vadd.f32 %v738, %v792
    %v794 = vmul.f32 %v791, %v753
    %v795 = vadd.f32 %v740, %v794
    %796 = vst [vmem:[#allocation12] sm:$0xff] %v793
    %797 = vst [vmem:[#allocation13] sm:$0xff] %v795
    // Predicated region
    $region42: #{tpu_custom_call.1} parent=1 // pred_check
      _
    $region43: #{tpu_custom_call.1} parent=1 // pred_check_branch
      %799 = sbr.rel (0) target = $region45
    $region44: #{tpu_custom_call.1} parent=1 // pred_region
      %s801 = ssub.s32 128, 128
      %802 = vsyncadd [#allocation4], %s801
      %s804 = sshll.u32 [#allocation12], 4
      %s805 = int_to_ptr.vmem [resolvable:$true] %s804
      %807 = dma.vmem_to_hbm [thread:$0]  %s805, 128, %s5, [#allocation4]
    $region45: #{tpu_custom_call.1} parent=1 // pred_fallthru
      _
    // Predicated region
    $region46: #{tpu_custom_call.1} parent=1 // pred_check
      _
    $region47: #{tpu_custom_call.1} parent=1 // pred_check_branch
      %809 = sbr.rel (0) target = $region49
    $region48: #{tpu_custom_call.1} parent=1 // pred_region
      %s811 = ssub.s32 128, 128
      %812 = vsyncadd [#allocation14], %s811
      %s814 = sshll.u32 [#allocation13], 4
      %s815 = int_to_ptr.vmem [resolvable:$true] %s814
      %817 = dma.vmem_to_hbm [thread:$0]  %s815, 128, %s6, [#allocation14]
    $region49: #{tpu_custom_call.1} parent=1 // pred_fallthru
      _
    // Predicated region
    $region50: #{tpu_custom_call.1} parent=1 // pred_check
      _
    $region51: #{tpu_custom_call.1} parent=1 // pred_check_branch
      %819 = sbr.rel (0) target = $region53
    $region52: #{tpu_custom_call.1} parent=1 // pred_region
      %820 = dma.done [#allocation4], 128
    $region53: #{tpu_custom_call.1} parent=1 // pred_fallthru
      _
    // Predicated region
    $region54: #{tpu_custom_call.1} parent=1 // pred_check
      _
    $region55: #{tpu_custom_call.1} parent=1 // pred_check_branch
      %822 = sbr.rel (0) target = $region57
    $region56: #{tpu_custom_call.1} parent=1 // pred_region
      %823 = dma.done [#allocation14], 128
    $region57: #{tpu_custom_call.1} parent=1 // pred_fallthru
      _
    %824 = vsyncpa [#allocation3], 1
    %825 = vsyncpa [#allocation4], 1
    %826 = vsyncpa [#allocation14], 1
    %827 = vsyncpa [#allocation5], 1
    %828 = vsyncpa [#allocation8], 1
    %829 = vsyncpa [#allocation11], 1

</llo_original>
